<compile_context>
chip_gen: v6e
topology: v6e:2x2x1
jax: 0.10.0
libtpu: 0.0.40
codegen_flags: <defaults>
</compile_context>

<pallas_src>
import jax
import jax.numpy as jnp
from jax.experimental import pallas as pl
from jax.experimental.pallas import tpu as pltpu


# ----------------------------- Pallas kernel ------------------------------ #
def _make_lstm_forecaster_kernel(num_layers: int, hidden: int, seq_len: int,
                                 batch_pad: int):
    T, Bp, H = seq_len, batch_pad, hidden

    def kernel(*refs):
        x_ref = refs[0]                               # (T*Bp, C)  time-major, batch-padded
        layer_refs = refs[1:1 + 3 * num_layers]       # (wih, whh, b) per layer (g-cols pre-scaled x2)
        wfc_ref = refs[1 + 3 * num_layers]            # (1, H)
        bfc_ref = refs[2 + 3 * num_layers]            # (1, 1)  in SMEM
        out_ref = refs[3 + 3 * num_layers]            # (Bp, 1)
        xproj_ref = refs[4 + 3 * num_layers]          # VMEM scratch (T*Bp, 4H)

        # Hoist all weights into vregs once (not per unrolled step).
        wih = [layer_refs[3 * l + 0][...] for l in range(num_layers)]
        whh = [layer_refs[3 * l + 1][...] for l in range(num_layers)]
        bias = [layer_refs[3 * l + 2][...] for l in range(num_layers)]

        # Layer-0 input projection: one batched MXU matmul, bias folded once.
        # Written to VMEM scratch so it does not occupy 8 live vregs across the
        # fully-unrolled recurrence (the per-step (8,128) reload is hidden by
        # the vector-load slots).
        xproj_ref[...] = (
            jnp.dot(x_ref[...], wih[0], preferred_element_type=jnp.float32)
            + bias[0])

        h = [jnp.zeros((Bp, H), jnp.float32) for _ in range(num_layers)]
        c = [jnp.zeros((Bp, H), jnp.float32) for _ in range(num_layers)]

        def cell(gates, c_prev):
            # Single full-vreg sigmoid on the (Bp,4H) gates; the g-gate columns
            # were pre-scaled by 2 in the wrapper so tanh(z) == 2*sigmoid(2z)-1
            # (removes the full-vreg tanh from the serial EUP path).
            s = jax.nn.sigmoid(gates)
            i_g = s[:, 0 * H:1 * H]
            f_g = s[:, 1 * H:2 * H]
            g_g = 2.0 * s[:, 2 * H:3 * H] - 1.0
            o_g = s[:, 3 * H:4 * H]
            c_new = f_g * c_prev + i_g * g_g
            h_new = o_g * jnp.tanh(c_new)
            return h_new, c_new

        # Layer wavefront: step s computes layer-l cell at time t = s - l.
        # Serial chain length = T + L - 1; the layers' matmuls within a step
        # are mutually independent and pipeline through the MXU.
        # NOTE: relying on Mosaic to keep/hoist the constant W_hh MXU push
        # across the unrolled steps (explicit matmul_push_rhs not needed here).
        for s in range(T + num_layers - 1):
            h_new = list(h)
            c_new = list(c)
            for l in range(num_layers):
                t = s - l
                if 0 <= t < T:
                    hh = jnp.dot(h[l], whh[l],
                                 preferred_element_type=jnp.float32)
                    if l == 0:
                        gates = xproj_ref[t * Bp:(t + 1) * Bp, :] + hh
                    else:
                        # Per-step input projection of the layer below; this
                        # matmul is independent of `hh` -> both pipeline.
                        xh = jnp.dot(h[l - 1], wih[l],
                                     preferred_element_type=jnp.float32)
                        gates = xh + hh + bias[l]
                    h_new[l], c_new[l] = cell(gates, c[l])
            h, c = h_new, c_new

        # Linear(H, 1) head: VPU multiply + lane reduce (no N=1 MXU matmul);
        # the scalar bias lives in SMEM.
        y = (jnp.sum(h[num_layers - 1] * wfc_ref[...], axis=-1, keepdims=True)
             + bfc_ref[0, 0])                          # (Bp, 1)
        out_ref[...] = y.astype(out_ref.dtype)

    return kernel


# ------------------------------ JAX wrapper -------------------------------- #
def lstm_forecaster_pallas(x, params, *, num_layers: int, hidden: int):
    """x: (B, T, C) float32 (batch_first, like the PyTorch module)."""
    B, T, C = x.shape
    H = hidden
    Bp = max(((B + 7) // 8) * 8, 8)                    # pad batch to f32 sublane count

    x_tm = jnp.transpose(x, (1, 0, 2))                 # (T, B, C) time-major
    x_tm = jnp.pad(x_tm, ((0, 0), (0, Bp - B), (0, 0)))
    x_flat = x_tm.reshape(T * Bp, C)                   # row = t * Bp + b

    def scale_g(w):
        # Fold the 2x of tanh(z) = 2*sigmoid(2z)-1 into the g-gate columns.
        return w.at[..., 2 * H:3 * H].multiply(2.0)

    flat_inputs = [x_flat]
    for l in range(num_layers):
        flat_inputs.append(scale_g(params[f"wih{l}"]))
        flat_inputs.append(scale_g(params[f"whh{l}"]))
        flat_inputs.append(scale_g(params[f"b{l}"]))
    flat_inputs.append(params["wfc"].reshape(1, H))    # (H,1) -> (1,H) row for VPU reduce
    flat_inputs.append(params["bfc"].reshape(1, 1))    # true scalar -> SMEM

    vmem = pl.BlockSpec(memory_space=pltpu.MemorySpace.VMEM)
    smem = pl.BlockSpec(memory_space=pltpu.MemorySpace.SMEM)
    in_specs = [vmem] * (len(flat_inputs) - 1) + [smem]

    kernel = _make_lstm_forecaster_kernel(num_layers, H, T, Bp)
    out = pl.pallas_call(
        kernel,
        out_shape=jax.ShapeDtypeStruct((Bp, 1), jnp.float32),
        in_specs=in_specs,
        out_specs=vmem,
        scratch_shapes=[pltpu.VMEM((T * Bp, 4 * H), jnp.float32)],
    )(*flat_inputs)
    return out[:B]                                     # drop batch padding


# --------------------------- pure-JAX reference ---------------------------- #
def lstm_forecaster_ref(x, params, *, num_layers: int, hidden: int):
    B, T, C = x.shape
    h = [jnp.zeros((B, hidden), jnp.float32) for _ in range(num_layers)]
    c = [jnp.zeros((B, hidden), jnp.float32) for _ in range(num_layers)]
    for t in range(T):
        inp = x[:, t, :]
        for l in range(num_layers):
            gates = inp @ params[f"wih{l}"] + h[l] @ params[f"whh{l}"] + params[f"b{l}"]
            i_g = jax.nn.sigmoid(gates[:, 0 * hidden:1 * hidden])
            f_g = jax.nn.sigmoid(gates[:, 1 * hidden:2 * hidden])
            g_g = jnp.tanh(gates[:, 2 * hidden:3 * hidden])
            o_g = jax.nn.sigmoid(gates[:, 3 * hidden:4 * hidden])
            c[l] = f_g * c[l] + i_g * g_g
            h[l] = o_g * jnp.tanh(c[l])
            inp = h[l]
    return h[num_layers - 1] @ params["wfc"] + params["bfc"]


# --------------------------------- main ------------------------------------ #
if __name__ == "__main__":
    # Module config: LSTM(input_size=C, hidden_size=H, num_layers=L, batch_first=True)
    # followed by Linear(H, 1).  (nn.LSTM default dropout=0 -> nothing to model.)
    B, T, C, H, L = 2, 8, 4, 32, 2

    key = jax.random.PRNGKey(0)
    keys = jax.random.split(key, 4 * L + 3)

    params = {}
    ki = 0
    for l in range(L):
        in_dim = C if l == 0 else H
        # PyTorch stores W_ih: (4H, in), W_hh: (4H, H); here pre-transposed for
        # "x @ W" matmuls.  b = b_ih + b_hh folded into one (1, 4H) bias.
        params[f"wih{l}"] = 0.1 * jax.random.normal(keys[ki], (in_dim, 4 * H), jnp.float32); ki += 1
        params[f"whh{l}"] = 0.1 * jax.random.normal(keys[ki], (H, 4 * H), jnp.float32); ki += 1
        b_ih = 0.1 * jax.random.normal(keys[ki], (4 * H,), jnp.float32); ki += 1
        b_hh = 0.1 * jax.random.normal(keys[ki], (4 * H,), jnp.float32); ki += 1
        params[f"b{l}"] = (b_ih + b_hh)[None, :]
    params["wfc"] = 0.1 * jax.random.normal(keys[ki], (H, 1), jnp.float32); ki += 1
    params["bfc"] = 0.1 * jax.random.normal(keys[ki], (1, 1), jnp.float32); ki += 1

    x = jax.random.normal(keys[ki], (B, T, C), jnp.float32)

    y = lstm_forecaster_pallas(x, params, num_layers=L, hidden=H)
    y = jax.block_until_ready(y)

    y_ref = lstm_forecaster_ref(x, params, num_layers=L, hidden=H)
    assert y.shape == (B, 1), y.shape
    # Kernel uses tanh(z) = 2*sigmoid(2z)-1 (g-gate scale folded into weights);
    # allow a slightly looser tolerance for the transcendental-approximation
    # difference accumulated over T steps.
    assert jnp.allclose(y, y_ref, atol=1e-4, rtol=1e-4), (y, y_ref)

    print("KERNEL_OK")
</pallas_src>

<mosaic_0001>
module attributes {stable_mosaic.version = 11 : i64} {
  func.func @kernel(%arg0: memref<64x4xf32, #tpu.memory_space<vmem>>, %arg1: memref<4x128xf32, #tpu.memory_space<vmem>>, %arg2: memref<32x128xf32, #tpu.memory_space<vmem>>, %arg3: memref<1x128xf32, #tpu.memory_space<vmem>>, %arg4: memref<32x128xf32, #tpu.memory_space<vmem>>, %arg5: memref<32x128xf32, #tpu.memory_space<vmem>>, %arg6: memref<1x128xf32, #tpu.memory_space<vmem>>, %arg7: memref<1x32xf32, #tpu.memory_space<vmem>>, %arg8: memref<1x1xf32, #tpu.memory_space<smem>>, %arg9: memref<8x1xf32, #tpu.memory_space<vmem>>, %arg10: memref<64x128xf32, #tpu.memory_space<vmem>>) attributes {dimension_semantics = [], scalar_prefetch = 0 : i64, scratch_operands = 1 : i64, tpu.core_type = #tpu.core_type<tc>} {
    %c0 = arith.constant 0 : index
    %c0_0 = arith.constant 0 : index
    %0 = vector.load %arg1[%c0, %c0_0] : memref<4x128xf32, #tpu.memory_space<vmem>>, vector<4x128xf32>
    %c0_1 = arith.constant 0 : index
    %c0_2 = arith.constant 0 : index
    %1 = vector.load %arg4[%c0_1, %c0_2] : memref<32x128xf32, #tpu.memory_space<vmem>>, vector<32x128xf32>
    %c0_3 = arith.constant 0 : index
    %c0_4 = arith.constant 0 : index
    %2 = vector.load %arg2[%c0_3, %c0_4] : memref<32x128xf32, #tpu.memory_space<vmem>>, vector<32x128xf32>
    %c0_5 = arith.constant 0 : index
    %c0_6 = arith.constant 0 : index
    %3 = vector.load %arg5[%c0_5, %c0_6] : memref<32x128xf32, #tpu.memory_space<vmem>>, vector<32x128xf32>
    %c0_7 = arith.constant 0 : index
    %c0_8 = arith.constant 0 : index
    %4 = vector.load %arg3[%c0_7, %c0_8] : memref<1x128xf32, #tpu.memory_space<vmem>>, vector<1x128xf32>
    %c0_9 = arith.constant 0 : index
    %c0_10 = arith.constant 0 : index
    %5 = vector.load %arg6[%c0_9, %c0_10] : memref<1x128xf32, #tpu.memory_space<vmem>>, vector<1x128xf32>
    %c0_11 = arith.constant 0 : index
    %c0_12 = arith.constant 0 : index
    %6 = vector.load %arg0[%c0_11, %c0_12] : memref<64x4xf32, #tpu.memory_space<vmem>>, vector<64x4xf32>
    %cst = arith.constant dense<0.000000e+00> : vector<64x128xf32>
    %7 = tpu.matmul %6, %0, %cst {dimension_numbers = #tpu.dot_dimension_numbers<[1], [0], [0], [1], [0, 0, 1, 1], [], []>} : vector<64x4xf32>, vector<4x128xf32>, vector<64x128xf32> -> vector<64x128xf32>
    %8 = vector.broadcast %4 : vector<1x128xf32> to vector<64x128xf32>
    %9 = arith.addf %7, %8 : vector<64x128xf32>
    %c0_13 = arith.constant 0 : index
    %c0_14 = arith.constant 0 : index
    %10 = vector.load %arg10[%c0_13, %c0_14] : memref<64x128xf32, #tpu.memory_space<vmem>>, vector<64x128xf32>
    tpu.vector_store %arg10[%c0_13, %c0_14], %9 {strides = array<i32>} : memref<64x128xf32, #tpu.memory_space<vmem>>, vector<64x128xf32>,
    %cst_15 = arith.constant 0.000000e+00 : f32
    %11 = vector.broadcast %cst_15 : f32 to vector<8x32xf32>
    %cst_16 = arith.constant 0.000000e+00 : f32
    %12 = vector.broadcast %cst_16 : f32 to vector<8x32xf32>
    %cst_17 = arith.constant 0.000000e+00 : f32
    %13 = vector.broadcast %cst_17 : f32 to vector<8x32xf32>
    %cst_18 = arith.constant 0.000000e+00 : f32
    %14 = vector.broadcast %cst_18 : f32 to vector<8x32xf32>
    %cst_19 = arith.constant dense<0.000000e+00> : vector<8x128xf32>
    %15 = tpu.matmul %11, %2, %cst_19 {dimension_numbers = #tpu.dot_dimension_numbers<[1], [0], [0], [1], [0, 0, 1, 1], [], []>} : vector<8x32xf32>, vector<32x128xf32>, vector<8x128xf32> -> vector<8x128xf32>
    %c0_20 = arith.constant 0 : index
    %c0_21 = arith.constant 0 : index
    %16 = vector.load %arg10[%c0_20, %c0_21] : memref<64x128xf32, #tpu.memory_space<vmem>>, vector<8x128xf32>
    %17 = arith.addf %16, %15 : vector<8x128xf32>
    %18 = arith.negf %17 : vector<8x128xf32>
    %19 = math.exp %18 : vector<8x128xf32>
    %cst_22 = arith.constant 1.000000e+00 : f32
    %20 = vector.broadcast %cst_22 : f32 to vector<8x128xf32>
    %21 = arith.addf %20, %19 : vector<8x128xf32>
    %22 = arith.divf %20, %21 : vector<8x128xf32>
    %23 = vector.extract_strided_slice %22 {offsets = [0, 0], sizes = [8, 32], strides = [1, 1]} : vector<8x128xf32> to vector<8x32xf32>
    %24 = vector.extract_strided_slice %22 {offsets = [0, 32], sizes = [8, 32], strides = [1, 1]} : vector<8x128xf32> to vector<8x32xf32>
    %25 = vector.extract_strided_slice %22 {offsets = [0, 64], sizes = [8, 32], strides = [1, 1]} : vector<8x128xf32> to vector<8x32xf32>
    %cst_23 = arith.constant 2.000000e+00 : f32
    %26 = vector.broadcast %cst_23 : f32 to vector<8x32xf32>
    %27 = arith.mulf %26, %25 : vector<8x32xf32>
    %cst_24 = arith.constant 1.000000e+00 : f32
    %28 = vector.broadcast %cst_24 : f32 to vector<8x32xf32>
    %29 = arith.subf %27, %28 : vector<8x32xf32>
    %30 = vector.extract_strided_slice %22 {offsets = [0, 96], sizes = [8, 32], strides = [1, 1]} : vector<8x128xf32> to vector<8x32xf32>
    %31 = arith.mulf %24, %13 : vector<8x32xf32>
    %32 = arith.mulf %23, %29 : vector<8x32xf32>
    %33 = arith.addf %31, %32 : vector<8x32xf32>
    %34 = math.tanh %33 : vector<8x32xf32>
    %35 = arith.mulf %30, %34 : vector<8x32xf32>
    %cst_25 = arith.constant dense<0.000000e+00> : vector<8x128xf32>
    %36 = tpu.matmul %35, %2, %cst_25 {dimension_numbers = #tpu.dot_dimension_numbers<[1], [0], [0], [1], [0, 0, 1, 1], [], []>} : vector<8x32xf32>, vector<32x128xf32>, vector<8x128xf32> -> vector<8x128xf32>
    %c8 = arith.constant 8 : index
    %c0_26 = arith.constant 0 : index
    %37 = vector.load %arg10[%c8, %c0_26] : memref<64x128xf32, #tpu.memory_space<vmem>>, vector<8x128xf32>
    %38 = arith.addf %37, %36 : vector<8x128xf32>
    %39 = arith.negf %38 : vector<8x128xf32>
    %40 = math.exp %39 : vector<8x128xf32>
    %cst_27 = arith.constant 1.000000e+00 : f32
    %41 = vector.broadcast %cst_27 : f32 to vector<8x128xf32>
    %42 = arith.addf %41, %40 : vector<8x128xf32>
    %43 = arith.divf %41, %42 : vector<8x128xf32>
    %44 = vector.extract_strided_slice %43 {offsets = [0, 0], sizes = [8, 32], strides = [1, 1]} : vector<8x128xf32> to vector<8x32xf32>
    %45 = vector.extract_strided_slice %43 {offsets = [0, 32], sizes = [8, 32], strides = [1, 1]} : vector<8x128xf32> to vector<8x32xf32>
    %46 = vector.extract_strided_slice %43 {offsets = [0, 64], sizes = [8, 32], strides = [1, 1]} : vector<8x128xf32> to vector<8x32xf32>
    %cst_28 = arith.constant 2.000000e+00 : f32
    %47 = vector.broadcast %cst_28 : f32 to vector<8x32xf32>
    %48 = arith.mulf %47, %46 : vector<8x32xf32>
    %cst_29 = arith.constant 1.000000e+00 : f32
    %49 = vector.broadcast %cst_29 : f32 to vector<8x32xf32>
    %50 = arith.subf %48, %49 : vector<8x32xf32>
    %51 = vector.extract_strided_slice %43 {offsets = [0, 96], sizes = [8, 32], strides = [1, 1]} : vector<8x128xf32> to vector<8x32xf32>
    %52 = arith.mulf %45, %33 : vector<8x32xf32>
    %53 = arith.mulf %44, %50 : vector<8x32xf32>
    %54 = arith.addf %52, %53 : vector<8x32xf32>
    %55 = math.tanh %54 : vector<8x32xf32>
    %56 = arith.mulf %51, %55 : vector<8x32xf32>
    %cst_30 = arith.constant dense<0.000000e+00> : vector<8x128xf32>
    %57 = tpu.matmul %12, %3, %cst_30 {dimension_numbers = #tpu.dot_dimension_numbers<[1], [0], [0], [1], [0, 0, 1, 1], [], []>} : vector<8x32xf32>, vector<32x128xf32>, vector<8x128xf32> -> vector<8x128xf32>
    %cst_31 = arith.constant dense<0.000000e+00> : vector<8x128xf32>
    %58 = tpu.matmul %35, %1, %cst_31 {dimension_numbers = #tpu.dot_dimension_numbers<[1], [0], [0], [1], [0, 0, 1, 1], [], []>} : vector<8x32xf32>, vector<32x128xf32>, vector<8x128xf32> -> vector<8x128xf32>
    %59 = arith.addf %58, %57 : vector<8x128xf32>
    %60 = vector.broadcast %5 : vector<1x128xf32> to vector<8x128xf32>
    %61 = arith.addf %59, %60 : vector<8x128xf32>
    %62 = arith.negf %61 : vector<8x128xf32>
    %63 = math.exp %62 : vector<8x128xf32>
    %cst_32 = arith.constant 1.000000e+00 : f32
    %64 = vector.broadcast %cst_32 : f32 to vector<8x128xf32>
    %65 = arith.addf %64, %63 : vector<8x128xf32>
    %66 = arith.divf %64, %65 : vector<8x128xf32>
    %67 = vector.extract_strided_slice %66 {offsets = [0, 0], sizes = [8, 32], strides = [1, 1]} : vector<8x128xf32> to vector<8x32xf32>
    %68 = vector.extract_strided_slice %66 {offsets = [0, 32], sizes = [8, 32], strides = [1, 1]} : vector<8x128xf32> to vector<8x32xf32>
    %69 = vector.extract_strided_slice %66 {offsets = [0, 64], sizes = [8, 32], strides = [1, 1]} : vector<8x128xf32> to vector<8x32xf32>
    %cst_33 = arith.constant 2.000000e+00 : f32
    %70 = vector.broadcast %cst_33 : f32 to vector<8x32xf32>
    %71 = arith.mulf %70, %69 : vector<8x32xf32>
    %cst_34 = arith.constant 1.000000e+00 : f32
    %72 = vector.broadcast %cst_34 : f32 to vector<8x32xf32>
    %73 = arith.subf %71, %72 : vector<8x32xf32>
    %74 = vector.extract_strided_slice %66 {offsets = [0, 96], sizes = [8, 32], strides = [1, 1]} : vector<8x128xf32> to vector<8x32xf32>
    %75 = arith.mulf %68, %14 : vector<8x32xf32>
    %76 = arith.mulf %67, %73 : vector<8x32xf32>
    %77 = arith.addf %75, %76 : vector<8x32xf32>
    %78 = math.tanh %77 : vector<8x32xf32>
    %79 = arith.mulf %74, %78 : vector<8x32xf32>
    %cst_35 = arith.constant dense<0.000000e+00> : vector<8x128xf32>
    %80 = tpu.matmul %56, %2, %cst_35 {dimension_numbers = #tpu.dot_dimension_numbers<[1], [0], [0], [1], [0, 0, 1, 1], [], []>} : vector<8x32xf32>, vector<32x128xf32>, vector<8x128xf32> -> vector<8x128xf32>
    %c16 = arith.constant 16 : index
    %c0_36 = arith.constant 0 : index
    %81 = vector.load %arg10[%c16, %c0_36] : memref<64x128xf32, #tpu.memory_space<vmem>>, vector<8x128xf32>
    %82 = arith.addf %81, %80 : vector<8x128xf32>
    %83 = arith.negf %82 : vector<8x128xf32>
    %84 = math.exp %83 : vector<8x128xf32>
    %cst_37 = arith.constant 1.000000e+00 : f32
    %85 = vector.broadcast %cst_37 : f32 to vector<8x128xf32>
    %86 = arith.addf %85, %84 : vector<8x128xf32>
    %87 = arith.divf %85, %86 : vector<8x128xf32>
    %88 = vector.extract_strided_slice %87 {offsets = [0, 0], sizes = [8, 32], strides = [1, 1]} : vector<8x128xf32> to vector<8x32xf32>
    %89 = vector.extract_strided_slice %87 {offsets = [0, 32], sizes = [8, 32], strides = [1, 1]} : vector<8x128xf32> to vector<8x32xf32>
    %90 = vector.extract_strided_slice %87 {offsets = [0, 64], sizes = [8, 32], strides = [1, 1]} : vector<8x128xf32> to vector<8x32xf32>
    %cst_38 = arith.constant 2.000000e+00 : f32
    %91 = vector.broadcast %cst_38 : f32 to vector<8x32xf32>
    %92 = arith.mulf %91, %90 : vector<8x32xf32>
    %cst_39 = arith.constant 1.000000e+00 : f32
    %93 = vector.broadcast %cst_39 : f32 to vector<8x32xf32>
    %94 = arith.subf %92, %93 : vector<8x32xf32>
    %95 = vector.extract_strided_slice %87 {offsets = [0, 96], sizes = [8, 32], strides = [1, 1]} : vector<8x128xf32> to vector<8x32xf32>
    %96 = arith.mulf %89, %54 : vector<8x32xf32>
    %97 = arith.mulf %88, %94 : vector<8x32xf32>
    %98 = arith.addf %96, %97 : vector<8x32xf32>
    %99 = math.tanh %98 : vector<8x32xf32>
    %100 = arith.mulf %95, %99 : vector<8x32xf32>
    %cst_40 = arith.constant dense<0.000000e+00> : vector<8x128xf32>
    %101 = tpu.matmul %79, %3, %cst_40 {dimension_numbers = #tpu.dot_dimension_numbers<[1], [0], [0], [1], [0, 0, 1, 1], [], []>} : vector<8x32xf32>, vector<32x128xf32>, vector<8x128xf32> -> vector<8x128xf32>
    %cst_41 = arith.constant dense<0.000000e+00> : vector<8x128xf32>
    %102 = tpu.matmul %56, %1, %cst_41 {dimension_numbers = #tpu.dot_dimension_numbers<[1], [0], [0], [1], [0, 0, 1, 1], [], []>} : vector<8x32xf32>, vector<32x128xf32>, vector<8x128xf32> -> vector<8x128xf32>
    %103 = arith.addf %102, %101 : vector<8x128xf32>
    %104 = vector.broadcast %5 : vector<1x128xf32> to vector<8x128xf32>
    %105 = arith.addf %103, %104 : vector<8x128xf32>
    %106 = arith.negf %105 : vector<8x128xf32>
    %107 = math.exp %106 : vector<8x128xf32>
    %cst_42 = arith.constant 1.000000e+00 : f32
    %108 = vector.broadcast %cst_42 : f32 to vector<8x128xf32>
    %109 = arith.addf %108, %107 : vector<8x128xf32>
    %110 = arith.divf %108, %109 : vector<8x128xf32>
    %111 = vector.extract_strided_slice %110 {offsets = [0, 0], sizes = [8, 32], strides = [1, 1]} : vector<8x128xf32> to vector<8x32xf32>
    %112 = vector.extract_strided_slice %110 {offsets = [0, 32], sizes = [8, 32], strides = [1, 1]} : vector<8x128xf32> to vector<8x32xf32>
    %113 = vector.extract_strided_slice %110 {offsets = [0, 64], sizes = [8, 32], strides = [1, 1]} : vector<8x128xf32> to vector<8x32xf32>
    %cst_43 = arith.constant 2.000000e+00 : f32
    %114 = vector.broadcast %cst_43 : f32 to vector<8x32xf32>
    %115 = arith.mulf %114, %113 : vector<8x32xf32>
    %cst_44 = arith.constant 1.000000e+00 : f32
    %116 = vector.broadcast %cst_44 : f32 to vector<8x32xf32>
    %117 = arith.subf %115, %116 : vector<8x32xf32>
    %118 = vector.extract_strided_slice %110 {offsets = [0, 96], sizes = [8, 32], strides = [1, 1]} : vector<8x128xf32> to vector<8x32xf32>
    %119 = arith.mulf %112, %77 : vector<8x32xf32>
    %120 = arith.mulf %111, %117 : vector<8x32xf32>
    %121 = arith.addf %119, %120 : vector<8x32xf32>
    %122 = math.tanh %121 : vector<8x32xf32>
    %123 = arith.mulf %118, %122 : vector<8x32xf32>
    %cst_45 = arith.constant dense<0.000000e+00> : vector<8x128xf32>
    %124 = tpu.matmul %100, %2, %cst_45 {dimension_numbers = #tpu.dot_dimension_numbers<[1], [0], [0], [1], [0, 0, 1, 1], [], []>} : vector<8x32xf32>, vector<32x128xf32>, vector<8x128xf32> -> vector<8x128xf32>
    %c24 = arith.constant 24 : index
    %c0_46 = arith.constant 0 : index
    %125 = vector.load %arg10[%c24, %c0_46] : memref<64x128xf32, #tpu.memory_space<vmem>>, vector<8x128xf32>
    %126 = arith.addf %125, %124 : vector<8x128xf32>
    %127 = arith.negf %126 : vector<8x128xf32>
    %128 = math.exp %127 : vector<8x128xf32>
    %cst_47 = arith.constant 1.000000e+00 : f32
    %129 = vector.broadcast %cst_47 : f32 to vector<8x128xf32>
    %130 = arith.addf %129, %128 : vector<8x128xf32>
    %131 = arith.divf %129, %130 : vector<8x128xf32>
    %132 = vector.extract_strided_slice %131 {offsets = [0, 0], sizes = [8, 32], strides = [1, 1]} : vector<8x128xf32> to vector<8x32xf32>
    %133 = vector.extract_strided_slice %131 {offsets = [0, 32], sizes = [8, 32], strides = [1, 1]} : vector<8x128xf32> to vector<8x32xf32>
    %134 = vector.extract_strided_slice %131 {offsets = [0, 64], sizes = [8, 32], strides = [1, 1]} : vector<8x128xf32> to vector<8x32xf32>
    %cst_48 = arith.constant 2.000000e+00 : f32
    %135 = vector.broadcast %cst_48 : f32 to vector<8x32xf32>
    %136 = arith.mulf %135, %134 : vector<8x32xf32>
    %cst_49 = arith.constant 1.000000e+00 : f32
    %137 = vector.broadcast %cst_49 : f32 to vector<8x32xf32>
    %138 = arith.subf %136, %137 : vector<8x32xf32>
    %139 = vector.extract_strided_slice %131 {offsets = [0, 96], sizes = [8, 32], strides = [1, 1]} : vector<8x128xf32> to vector<8x32xf32>
    %140 = arith.mulf %133, %98 : vector<8x32xf32>
    %141 = arith.mulf %132, %138 : vector<8x32xf32>
    %142 = arith.addf %140, %141 : vector<8x32xf32>
    %143 = math.tanh %142 : vector<8x32xf32>
    %144 = arith.mulf %139, %143 : vector<8x32xf32>
    %cst_50 = arith.constant dense<0.000000e+00> : vector<8x128xf32>
    %145 = tpu.matmul %123, %3, %cst_50 {dimension_numbers = #tpu.dot_dimension_numbers<[1], [0], [0], [1], [0, 0, 1, 1], [], []>} : vector<8x32xf32>, vector<32x128xf32>, vector<8x128xf32> -> vector<8x128xf32>
    %cst_51 = arith.constant dense<0.000000e+00> : vector<8x128xf32>
    %146 = tpu.matmul %100, %1, %cst_51 {dimension_numbers = #tpu.dot_dimension_numbers<[1], [0], [0], [1], [0, 0, 1, 1], [], []>} : vector<8x32xf32>, vector<32x128xf32>, vector<8x128xf32> -> vector<8x128xf32>
    %147 = arith.addf %146, %145 : vector<8x128xf32>
    %148 = vector.broadcast %5 : vector<1x128xf32> to vector<8x128xf32>
    %149 = arith.addf %147, %148 : vector<8x128xf32>
    %150 = arith.negf %149 : vector<8x128xf32>
    %151 = math.exp %150 : vector<8x128xf32>
    %cst_52 = arith.constant 1.000000e+00 : f32
    %152 = vector.broadcast %cst_52 : f32 to vector<8x128xf32>
    %153 = arith.addf %152, %151 : vector<8x128xf32>
    %154 = arith.divf %152, %153 : vector<8x128xf32>
    %155 = vector.extract_strided_slice %154 {offsets = [0, 0], sizes = [8, 32], strides = [1, 1]} : vector<8x128xf32> to vector<8x32xf32>
    %156 = vector.extract_strided_slice %154 {offsets = [0, 32], sizes = [8, 32], strides = [1, 1]} : vector<8x128xf32> to vector<8x32xf32>
    %157 = vector.extract_strided_slice %154 {offsets = [0, 64], sizes = [8, 32], strides = [1, 1]} : vector<8x128xf32> to vector<8x32xf32>
    %cst_53 = arith.constant 2.000000e+00 : f32
    %158 = vector.broadcast %cst_53 : f32 to vector<8x32xf32>
    %159 = arith.mulf %158, %157 : vector<8x32xf32>
    %cst_54 = arith.constant 1.000000e+00 : f32
    %160 = vector.broadcast %cst_54 : f32 to vector<8x32xf32>
    %161 = arith.subf %159, %160 : vector<8x32xf32>
    %162 = vector.extract_strided_slice %154 {offsets = [0, 96], sizes = [8, 32], strides = [1, 1]} : vector<8x128xf32> to vector<8x32xf32>
    %163 = arith.mulf %156, %121 : vector<8x32xf32>
    %164 = arith.mulf %155, %161 : vector<8x32xf32>
    %165 = arith.addf %163, %164 : vector<8x32xf32>
    %166 = math.tanh %165 : vector<8x32xf32>
    %167 = arith.mulf %162, %166 : vector<8x32xf32>
    %cst_55 = arith.constant dense<0.000000e+00> : vector<8x128xf32>
    %168 = tpu.matmul %144, %2, %cst_55 {dimension_numbers = #tpu.dot_dimension_numbers<[1], [0], [0], [1], [0, 0, 1, 1], [], []>} : vector<8x32xf32>, vector<32x128xf32>, vector<8x128xf32> -> vector<8x128xf32>
    %c32 = arith.constant 32 : index
    %c0_56 = arith.constant 0 : index
    %169 = vector.load %arg10[%c32, %c0_56] : memref<64x128xf32, #tpu.memory_space<vmem>>, vector<8x128xf32>
    %170 = arith.addf %169, %168 : vector<8x128xf32>
    %171 = arith.negf %170 : vector<8x128xf32>
    %172 = math.exp %171 : vector<8x128xf32>
    %cst_57 = arith.constant 1.000000e+00 : f32
    %173 = vector.broadcast %cst_57 : f32 to vector<8x128xf32>
    %174 = arith.addf %173, %172 : vector<8x128xf32>
    %175 = arith.divf %173, %174 : vector<8x128xf32>
    %176 = vector.extract_strided_slice %175 {offsets = [0, 0], sizes = [8, 32], strides = [1, 1]} : vector<8x128xf32> to vector<8x32xf32>
    %177 = vector.extract_strided_slice %175 {offsets = [0, 32], sizes = [8, 32], strides = [1, 1]} : vector<8x128xf32> to vector<8x32xf32>
    %178 = vector.extract_strided_slice %175 {offsets = [0, 64], sizes = [8, 32], strides = [1, 1]} : vector<8x128xf32> to vector<8x32xf32>
    %cst_58 = arith.constant 2.000000e+00 : f32
    %179 = vector.broadcast %cst_58 : f32 to vector<8x32xf32>
    %180 = arith.mulf %179, %178 : vector<8x32xf32>
    %cst_59 = arith.constant 1.000000e+00 : f32
    %181 = vector.broadcast %cst_59 : f32 to vector<8x32xf32>
    %182 = arith.subf %180, %181 : vector<8x32xf32>
    %183 = vector.extract_strided_slice %175 {offsets = [0, 96], sizes = [8, 32], strides = [1, 1]} : vector<8x128xf32> to vector<8x32xf32>
    %184 = arith.mulf %177, %142 : vector<8x32xf32>
    %185 = arith.mulf %176, %182 : vector<8x32xf32>
    %186 = arith.addf %184, %185 : vector<8x32xf32>
    %187 = math.tanh %186 : vector<8x32xf32>
    %188 = arith.mulf %183, %187 : vector<8x32xf32>
    %cst_60 = arith.constant dense<0.000000e+00> : vector<8x128xf32>
    %189 = tpu.matmul %167, %3, %cst_60 {dimension_numbers = #tpu.dot_dimension_numbers<[1], [0], [0], [1], [0, 0, 1, 1], [], []>} : vector<8x32xf32>, vector<32x128xf32>, vector<8x128xf32> -> vector<8x128xf32>
    %cst_61 = arith.constant dense<0.000000e+00> : vector<8x128xf32>
    %190 = tpu.matmul %144, %1, %cst_61 {dimension_numbers = #tpu.dot_dimension_numbers<[1], [0], [0], [1], [0, 0, 1, 1], [], []>} : vector<8x32xf32>, vector<32x128xf32>, vector<8x128xf32> -> vector<8x128xf32>
    %191 = arith.addf %190, %189 : vector<8x128xf32>
    %192 = vector.broadcast %5 : vector<1x128xf32> to vector<8x128xf32>
    %193 = arith.addf %191, %192 : vector<8x128xf32>
    %194 = arith.negf %193 : vector<8x128xf32>
    %195 = math.exp %194 : vector<8x128xf32>
    %cst_62 = arith.constant 1.000000e+00 : f32
    %196 = vector.broadcast %cst_62 : f32 to vector<8x128xf32>
    %197 = arith.addf %196, %195 : vector<8x128xf32>
    %198 = arith.divf %196, %197 : vector<8x128xf32>
    %199 = vector.extract_strided_slice %198 {offsets = [0, 0], sizes = [8, 32], strides = [1, 1]} : vector<8x128xf32> to vector<8x32xf32>
    %200 = vector.extract_strided_slice %198 {offsets = [0, 32], sizes = [8, 32], strides = [1, 1]} : vector<8x128xf32> to vector<8x32xf32>
    %201 = vector.extract_strided_slice %198 {offsets = [0, 64], sizes = [8, 32], strides = [1, 1]} : vector<8x128xf32> to vector<8x32xf32>
    %cst_63 = arith.constant 2.000000e+00 : f32
    %202 = vector.broadcast %cst_63 : f32 to vector<8x32xf32>
    %203 = arith.mulf %202, %201 : vector<8x32xf32>
    %cst_64 = arith.constant 1.000000e+00 : f32
    %204 = vector.broadcast %cst_64 : f32 to vector<8x32xf32>
    %205 = arith.subf %203, %204 : vector<8x32xf32>
    %206 = vector.extract_strided_slice %198 {offsets = [0, 96], sizes = [8, 32], strides = [1, 1]} : vector<8x128xf32> to vector<8x32xf32>
    %207 = arith.mulf %200, %165 : vector<8x32xf32>
    %208 = arith.mulf %199, %205 : vector<8x32xf32>
    %209 = arith.addf %207, %208 : vector<8x32xf32>
    %210 = math.tanh %209 : vector<8x32xf32>
    %211 = arith.mulf %206, %210 : vector<8x32xf32>
    %cst_65 = arith.constant dense<0.000000e+00> : vector<8x128xf32>
    %212 = tpu.matmul %188, %2, %cst_65 {dimension_numbers = #tpu.dot_dimension_numbers<[1], [0], [0], [1], [0, 0, 1, 1], [], []>} : vector<8x32xf32>, vector<32x128xf32>, vector<8x128xf32> -> vector<8x128xf32>
    %c40 = arith.constant 40 : index
    %c0_66 = arith.constant 0 : index
    %213 = vector.load %arg10[%c40, %c0_66] : memref<64x128xf32, #tpu.memory_space<vmem>>, vector<8x128xf32>
    %214 = arith.addf %213, %212 : vector<8x128xf32>
    %215 = arith.negf %214 : vector<8x128xf32>
    %216 = math.exp %215 : vector<8x128xf32>
    %cst_67 = arith.constant 1.000000e+00 : f32
    %217 = vector.broadcast %cst_67 : f32 to vector<8x128xf32>
    %218 = arith.addf %217, %216 : vector<8x128xf32>
    %219 = arith.divf %217, %218 : vector<8x128xf32>
    %220 = vector.extract_strided_slice %219 {offsets = [0, 0], sizes = [8, 32], strides = [1, 1]} : vector<8x128xf32> to vector<8x32xf32>
    %221 = vector.extract_strided_slice %219 {offsets = [0, 32], sizes = [8, 32], strides = [1, 1]} : vector<8x128xf32> to vector<8x32xf32>
    %222 = vector.extract_strided_slice %219 {offsets = [0, 64], sizes = [8, 32], strides = [1, 1]} : vector<8x128xf32> to vector<8x32xf32>
    %cst_68 = arith.constant 2.000000e+00 : f32
    %223 = vector.broadcast %cst_68 : f32 to vector<8x32xf32>
    %224 = arith.mulf %223, %222 : vector<8x32xf32>
    %cst_69 = arith.constant 1.000000e+00 : f32
    %225 = vector.broadcast %cst_69 : f32 to vector<8x32xf32>
    %226 = arith.subf %224, %225 : vector<8x32xf32>
    %227 = vector.extract_strided_slice %219 {offsets = [0, 96], sizes = [8, 32], strides = [1, 1]} : vector<8x128xf32> to vector<8x32xf32>
    %228 = arith.mulf %221, %186 : vector<8x32xf32>
    %229 = arith.mulf %220, %226 : vector<8x32xf32>
    %230 = arith.addf %228, %229 : vector<8x32xf32>
    %231 = math.tanh %230 : vector<8x32xf32>
    %232 = arith.mulf %227, %231 : vector<8x32xf32>
    %cst_70 = arith.constant dense<0.000000e+00> : vector<8x128xf32>
    %233 = tpu.matmul %211, %3, %cst_70 {dimension_numbers = #tpu.dot_dimension_numbers<[1], [0], [0], [1], [0, 0, 1, 1], [], []>} : vector<8x32xf32>, vector<32x128xf32>, vector<8x128xf32> -> vector<8x128xf32>
    %cst_71 = arith.constant dense<0.000000e+00> : vector<8x128xf32>
    %234 = tpu.matmul %188, %1, %cst_71 {dimension_numbers = #tpu.dot_dimension_numbers<[1], [0], [0], [1], [0, 0, 1, 1], [], []>} : vector<8x32xf32>, vector<32x128xf32>, vector<8x128xf32> -> vector<8x128xf32>
    %235 = arith.addf %234, %233 : vector<8x128xf32>
    %236 = vector.broadcast %5 : vector<1x128xf32> to vector<8x128xf32>
    %237 = arith.addf %235, %236 : vector<8x128xf32>
    %238 = arith.negf %237 : vector<8x128xf32>
    %239 = math.exp %238 : vector<8x128xf32>
    %cst_72 = arith.constant 1.000000e+00 : f32
    %240 = vector.broadcast %cst_72 : f32 to vector<8x128xf32>
    %241 = arith.addf %240, %239 : vector<8x128xf32>
    %242 = arith.divf %240, %241 : vector<8x128xf32>
    %243 = vector.extract_strided_slice %242 {offsets = [0, 0], sizes = [8, 32], strides = [1, 1]} : vector<8x128xf32> to vector<8x32xf32>
    %244 = vector.extract_strided_slice %242 {offsets = [0, 32], sizes = [8, 32], strides = [1, 1]} : vector<8x128xf32> to vector<8x32xf32>
    %245 = vector.extract_strided_slice %242 {offsets = [0, 64], sizes = [8, 32], strides = [1, 1]} : vector<8x128xf32> to vector<8x32xf32>
    %cst_73 = arith.constant 2.000000e+00 : f32
    %246 = vector.broadcast %cst_73 : f32 to vector<8x32xf32>
    %247 = arith.mulf %246, %245 : vector<8x32xf32>
    %cst_74 = arith.constant 1.000000e+00 : f32
    %248 = vector.broadcast %cst_74 : f32 to vector<8x32xf32>
    %249 = arith.subf %247, %248 : vector<8x32xf32>
    %250 = vector.extract_strided_slice %242 {offsets = [0, 96], sizes = [8, 32], strides = [1, 1]} : vector<8x128xf32> to vector<8x32xf32>
    %251 = arith.mulf %244, %209 : vector<8x32xf32>
    %252 = arith.mulf %243, %249 : vector<8x32xf32>
    %253 = arith.addf %251, %252 : vector<8x32xf32>
    %254 = math.tanh %253 : vector<8x32xf32>
    %255 = arith.mulf %250, %254 : vector<8x32xf32>
    %cst_75 = arith.constant dense<0.000000e+00> : vector<8x128xf32>
    %256 = tpu.matmul %232, %2, %cst_75 {dimension_numbers = #tpu.dot_dimension_numbers<[1], [0], [0], [1], [0, 0, 1, 1], [], []>} : vector<8x32xf32>, vector<32x128xf32>, vector<8x128xf32> -> vector<8x128xf32>
    %c48 = arith.constant 48 : index
    %c0_76 = arith.constant 0 : index
    %257 = vector.load %arg10[%c48, %c0_76] : memref<64x128xf32, #tpu.memory_space<vmem>>, vector<8x128xf32>
    %258 = arith.addf %257, %256 : vector<8x128xf32>
    %259 = arith.negf %258 : vector<8x128xf32>
    %260 = math.exp %259 : vector<8x128xf32>
    %cst_77 = arith.constant 1.000000e+00 : f32
    %261 = vector.broadcast %cst_77 : f32 to vector<8x128xf32>
    %262 = arith.addf %261, %260 : vector<8x128xf32>
    %263 = arith.divf %261, %262 : vector<8x128xf32>
    %264 = vector.extract_strided_slice %263 {offsets = [0, 0], sizes = [8, 32], strides = [1, 1]} : vector<8x128xf32> to vector<8x32xf32>
    %265 = vector.extract_strided_slice %263 {offsets = [0, 32], sizes = [8, 32], strides = [1, 1]} : vector<8x128xf32> to vector<8x32xf32>
    %266 = vector.extract_strided_slice %263 {offsets = [0, 64], sizes = [8, 32], strides = [1, 1]} : vector<8x128xf32> to vector<8x32xf32>
    %cst_78 = arith.constant 2.000000e+00 : f32
    %267 = vector.broadcast %cst_78 : f32 to vector<8x32xf32>
    %268 = arith.mulf %267, %266 : vector<8x32xf32>
    %cst_79 = arith.constant 1.000000e+00 : f32
    %269 = vector.broadcast %cst_79 : f32 to vector<8x32xf32>
    %270 = arith.subf %268, %269 : vector<8x32xf32>
    %271 = vector.extract_strided_slice %263 {offsets = [0, 96], sizes = [8, 32], strides = [1, 1]} : vector<8x128xf32> to vector<8x32xf32>
    %272 = arith.mulf %265, %230 : vector<8x32xf32>
    %273 = arith.mulf %264, %270 : vector<8x32xf32>
    %274 = arith.addf %272, %273 : vector<8x32xf32>
    %275 = math.tanh %274 : vector<8x32xf32>
    %276 = arith.mulf %271, %275 : vector<8x32xf32>
    %cst_80 = arith.constant dense<0.000000e+00> : vector<8x128xf32>
    %277 = tpu.matmul %255, %3, %cst_80 {dimension_numbers = #tpu.dot_dimension_numbers<[1], [0], [0], [1], [0, 0, 1, 1], [], []>} : vector<8x32xf32>, vector<32x128xf32>, vector<8x128xf32> -> vector<8x128xf32>
    %cst_81 = arith.constant dense<0.000000e+00> : vector<8x128xf32>
    %278 = tpu.matmul %232, %1, %cst_81 {dimension_numbers = #tpu.dot_dimension_numbers<[1], [0], [0], [1], [0, 0, 1, 1], [], []>} : vector<8x32xf32>, vector<32x128xf32>, vector<8x128xf32> -> vector<8x128xf32>
    %279 = arith.addf %278, %277 : vector<8x128xf32>
    %280 = vector.broadcast %5 : vector<1x128xf32> to vector<8x128xf32>
    %281 = arith.addf %279, %280 : vector<8x128xf32>
    %282 = arith.negf %281 : vector<8x128xf32>
    %283 = math.exp %282 : vector<8x128xf32>
    %cst_82 = arith.constant 1.000000e+00 : f32
    %284 = vector.broadcast %cst_82 : f32 to vector<8x128xf32>
    %285 = arith.addf %284, %283 : vector<8x128xf32>
    %286 = arith.divf %284, %285 : vector<8x128xf32>
    %287 = vector.extract_strided_slice %286 {offsets = [0, 0], sizes = [8, 32], strides = [1, 1]} : vector<8x128xf32> to vector<8x32xf32>
    %288 = vector.extract_strided_slice %286 {offsets = [0, 32], sizes = [8, 32], strides = [1, 1]} : vector<8x128xf32> to vector<8x32xf32>
    %289 = vector.extract_strided_slice %286 {offsets = [0, 64], sizes = [8, 32], strides = [1, 1]} : vector<8x128xf32> to vector<8x32xf32>
    %cst_83 = arith.constant 2.000000e+00 : f32
    %290 = vector.broadcast %cst_83 : f32 to vector<8x32xf32>
    %291 = arith.mulf %290, %289 : vector<8x32xf32>
    %cst_84 = arith.constant 1.000000e+00 : f32
    %292 = vector.broadcast %cst_84 : f32 to vector<8x32xf32>
    %293 = arith.subf %291, %292 : vector<8x32xf32>
    %294 = vector.extract_strided_slice %286 {offsets = [0, 96], sizes = [8, 32], strides = [1, 1]} : vector<8x128xf32> to vector<8x32xf32>
    %295 = arith.mulf %288, %253 : vector<8x32xf32>
    %296 = arith.mulf %287, %293 : vector<8x32xf32>
    %297 = arith.addf %295, %296 : vector<8x32xf32>
    %298 = math.tanh %297 : vector<8x32xf32>
    %299 = arith.mulf %294, %298 : vector<8x32xf32>
    %cst_85 = arith.constant dense<0.000000e+00> : vector<8x128xf32>
    %300 = tpu.matmul %276, %2, %cst_85 {dimension_numbers = #tpu.dot_dimension_numbers<[1], [0], [0], [1], [0, 0, 1, 1], [], []>} : vector<8x32xf32>, vector<32x128xf32>, vector<8x128xf32> -> vector<8x128xf32>
    %c56 = arith.constant 56 : index
    %c0_86 = arith.constant 0 : index
    %301 = vector.load %arg10[%c56, %c0_86] : memref<64x128xf32, #tpu.memory_space<vmem>>, vector<8x128xf32>
    %302 = arith.addf %301, %300 : vector<8x128xf32>
    %303 = arith.negf %302 : vector<8x128xf32>
    %304 = math.exp %303 : vector<8x128xf32>
    %cst_87 = arith.constant 1.000000e+00 : f32
    %305 = vector.broadcast %cst_87 : f32 to vector<8x128xf32>
    %306 = arith.addf %305, %304 : vector<8x128xf32>
    %307 = arith.divf %305, %306 : vector<8x128xf32>
    %308 = vector.extract_strided_slice %307 {offsets = [0, 0], sizes = [8, 32], strides = [1, 1]} : vector<8x128xf32> to vector<8x32xf32>
    %309 = vector.extract_strided_slice %307 {offsets = [0, 32], sizes = [8, 32], strides = [1, 1]} : vector<8x128xf32> to vector<8x32xf32>
    %310 = vector.extract_strided_slice %307 {offsets = [0, 64], sizes = [8, 32], strides = [1, 1]} : vector<8x128xf32> to vector<8x32xf32>
    %cst_88 = arith.constant 2.000000e+00 : f32
    %311 = vector.broadcast %cst_88 : f32 to vector<8x32xf32>
    %312 = arith.mulf %311, %310 : vector<8x32xf32>
    %cst_89 = arith.constant 1.000000e+00 : f32
    %313 = vector.broadcast %cst_89 : f32 to vector<8x32xf32>
    %314 = arith.subf %312, %313 : vector<8x32xf32>
    %315 = vector.extract_strided_slice %307 {offsets = [0, 96], sizes = [8, 32], strides = [1, 1]} : vector<8x128xf32> to vector<8x32xf32>
    %316 = arith.mulf %309, %274 : vector<8x32xf32>
    %317 = arith.mulf %308, %314 : vector<8x32xf32>
    %318 = arith.addf %316, %317 : vector<8x32xf32>
    %319 = math.tanh %318 : vector<8x32xf32>
    %320 = arith.mulf %315, %319 : vector<8x32xf32>
    %cst_90 = arith.constant dense<0.000000e+00> : vector<8x128xf32>
    %321 = tpu.matmul %299, %3, %cst_90 {dimension_numbers = #tpu.dot_dimension_numbers<[1], [0], [0], [1], [0, 0, 1, 1], [], []>} : vector<8x32xf32>, vector<32x128xf32>, vector<8x128xf32> -> vector<8x128xf32>
    %cst_91 = arith.constant dense<0.000000e+00> : vector<8x128xf32>
    %322 = tpu.matmul %276, %1, %cst_91 {dimension_numbers = #tpu.dot_dimension_numbers<[1], [0], [0], [1], [0, 0, 1, 1], [], []>} : vector<8x32xf32>, vector<32x128xf32>, vector<8x128xf32> -> vector<8x128xf32>
    %323 = arith.addf %322, %321 : vector<8x128xf32>
    %324 = vector.broadcast %5 : vector<1x128xf32> to vector<8x128xf32>
    %325 = arith.addf %323, %324 : vector<8x128xf32>
    %326 = arith.negf %325 : vector<8x128xf32>
    %327 = math.exp %326 : vector<8x128xf32>
    %cst_92 = arith.constant 1.000000e+00 : f32
    %328 = vector.broadcast %cst_92 : f32 to vector<8x128xf32>
    %329 = arith.addf %328, %327 : vector<8x128xf32>
    %330 = arith.divf %328, %329 : vector<8x128xf32>
    %331 = vector.extract_strided_slice %330 {offsets = [0, 0], sizes = [8, 32], strides = [1, 1]} : vector<8x128xf32> to vector<8x32xf32>
    %332 = vector.extract_strided_slice %330 {offsets = [0, 32], sizes = [8, 32], strides = [1, 1]} : vector<8x128xf32> to vector<8x32xf32>
    %333 = vector.extract_strided_slice %330 {offsets = [0, 64], sizes = [8, 32], strides = [1, 1]} : vector<8x128xf32> to vector<8x32xf32>
    %cst_93 = arith.constant 2.000000e+00 : f32
    %334 = vector.broadcast %cst_93 : f32 to vector<8x32xf32>
    %335 = arith.mulf %334, %333 : vector<8x32xf32>
    %cst_94 = arith.constant 1.000000e+00 : f32
    %336 = vector.broadcast %cst_94 : f32 to vector<8x32xf32>
    %337 = arith.subf %335, %336 : vector<8x32xf32>
    %338 = vector.extract_strided_slice %330 {offsets = [0, 96], sizes = [8, 32], strides = [1, 1]} : vector<8x128xf32> to vector<8x32xf32>
    %339 = arith.mulf %332, %297 : vector<8x32xf32>
    %340 = arith.mulf %331, %337 : vector<8x32xf32>
    %341 = arith.addf %339, %340 : vector<8x32xf32>
    %342 = math.tanh %341 : vector<8x32xf32>
    %343 = arith.mulf %338, %342 : vector<8x32xf32>
    %cst_95 = arith.constant dense<0.000000e+00> : vector<8x128xf32>
    %344 = tpu.matmul %343, %3, %cst_95 {dimension_numbers = #tpu.dot_dimension_numbers<[1], [0], [0], [1], [0, 0, 1, 1], [], []>} : vector<8x32xf32>, vector<32x128xf32>, vector<8x128xf32> -> vector<8x128xf32>
    %cst_96 = arith.constant dense<0.000000e+00> : vector<8x128xf32>
    %345 = tpu.matmul %320, %1, %cst_96 {dimension_numbers = #tpu.dot_dimension_numbers<[1], [0], [0], [1], [0, 0, 1, 1], [], []>} : vector<8x32xf32>, vector<32x128xf32>, vector<8x128xf32> -> vector<8x128xf32>
    %346 = arith.addf %345, %344 : vector<8x128xf32>
    %347 = vector.broadcast %5 : vector<1x128xf32> to vector<8x128xf32>
    %348 = arith.addf %346, %347 : vector<8x128xf32>
    %349 = arith.negf %348 : vector<8x128xf32>
    %350 = math.exp %349 : vector<8x128xf32>
    %cst_97 = arith.constant 1.000000e+00 : f32
    %351 = vector.broadcast %cst_97 : f32 to vector<8x128xf32>
    %352 = arith.addf %351, %350 : vector<8x128xf32>
    %353 = arith.divf %351, %352 : vector<8x128xf32>
    %354 = vector.extract_strided_slice %353 {offsets = [0, 0], sizes = [8, 32], strides = [1, 1]} : vector<8x128xf32> to vector<8x32xf32>
    %355 = vector.extract_strided_slice %353 {offsets = [0, 32], sizes = [8, 32], strides = [1, 1]} : vector<8x128xf32> to vector<8x32xf32>
    %356 = vector.extract_strided_slice %353 {offsets = [0, 64], sizes = [8, 32], strides = [1, 1]} : vector<8x128xf32> to vector<8x32xf32>
    %cst_98 = arith.constant 2.000000e+00 : f32
    %357 = vector.broadcast %cst_98 : f32 to vector<8x32xf32>
    %358 = arith.mulf %357, %356 : vector<8x32xf32>
    %cst_99 = arith.constant 1.000000e+00 : f32
    %359 = vector.broadcast %cst_99 : f32 to vector<8x32xf32>
    %360 = arith.subf %358, %359 : vector<8x32xf32>
    %361 = vector.extract_strided_slice %353 {offsets = [0, 96], sizes = [8, 32], strides = [1, 1]} : vector<8x128xf32> to vector<8x32xf32>
    %362 = arith.mulf %355, %341 : vector<8x32xf32>
    %363 = arith.mulf %354, %360 : vector<8x32xf32>
    %364 = arith.addf %362, %363 : vector<8x32xf32>
    %365 = math.tanh %364 : vector<8x32xf32>
    %366 = arith.mulf %361, %365 : vector<8x32xf32>
    %c0_100 = arith.constant 0 : index
    %c0_101 = arith.constant 0 : index
    %367 = vector.load %arg7[%c0_100, %c0_101] : memref<1x32xf32, #tpu.memory_space<vmem>>, vector<1x32xf32>
    %368 = vector.broadcast %367 : vector<1x32xf32> to vector<8x32xf32>
    %369 = arith.mulf %366, %368 : vector<8x32xf32>
    %cst_102 = arith.constant dense<0.000000e+00> : vector<8xf32>
    %370 = vector.multi_reduction <add>, %369, %cst_102 [1] : vector<8x32xf32> to vector<8xf32>
    %371 = vector.shape_cast %370 : vector<8xf32> to vector<8x1xf32>
    %c0_103 = arith.constant 0 : index
    %c0_104 = arith.constant 0 : index
    %372 = memref.load %arg8[%c0_103, %c0_104] : memref<1x1xf32, #tpu.memory_space<smem>>
    %373 = vector.broadcast %372 : f32 to vector<8x1xf32>
    %374 = arith.addf %371, %373 : vector<8x1xf32>
    %c0_105 = arith.constant 0 : index
    %c0_106 = arith.constant 0 : index
    %375 = vector.load %arg9[%c0_105, %c0_106] : memref<8x1xf32, #tpu.memory_space<vmem>>, vector<8x1xf32>
    tpu.vector_store %arg9[%c0_105, %c0_106], %374 {strides = array<i32>} : memref<8x1xf32, #tpu.memory_space<vmem>>, vector<8x1xf32>,
    return
  }
}

</mosaic_0001>

<llo_original>
// kernel: tpu_custom_call.1
$region0: #{tpu_custom_call.1}
  #allocation0 [shape = 'u32[]', space=smem, size = 0x4, offset = 0x4, fixed_abs, tag = 'smem constant byte address 0x4 - core index']
  #allocation1 [shape = 'u32[144,128]{1,0:T(1,128)}', space=vmem, size = 0x12000, scoped, tag = 'internal scratch']
  #allocation2 [shape = 'f32[64,128]{1,0:T(8,128)}', space=vmem, size = 0x8000, scoped, tag = 'scratch operand']
  #allocation3 [shape = 'f32[1,1]{1,0:T(1,128)S(6)}', space=smem, size = 0x200, scoped, tag = 'scoped memory for tpu_custom_call.1']
  %s0 = inlined_call_operand.vmem [shape: f32[64,4], index: 0, kind: input, shape index: {}]
  %s1 = inlined_call_operand.vmem [shape: f32[4,128], index: 1, kind: input, shape index: {}]
  %s2 = inlined_call_operand.vmem [shape: f32[32,128], index: 2, kind: input, shape index: {}]
  %s3 = inlined_call_operand.vmem [shape: f32[1,128], index: 3, kind: input, shape index: {}]
  %s4 = inlined_call_operand.vmem [shape: f32[32,128], index: 4, kind: input, shape index: {}]
  %s5 = inlined_call_operand.hbm [shape: f32[32,128], index: 5, kind: input, shape index: {}]
  %s6 = inlined_call_operand.vmem [shape: f32[1,128], index: 6, kind: input, shape index: {}]
  %s7 = inlined_call_operand.vmem [shape: f32[1,32], index: 7, kind: input, shape index: {}]
  %s8 = inlined_call_operand.<no memory space> [shape: f32[1,1], index: 8, kind: input, shape index: {}]
  %s9 = inlined_call_operand.vmem [shape: f32[8,1], index: 9, kind: output, shape index: {}]
  %s10 = sld [smem:[#allocation0]]
  $region50: #{tpu_custom_call.1} parent=0
    _
  %s12 = ssub.s32 1, %s10
  %s13 = scalar_select 0, %s12, %s10
  %14 = sst [smem:[#allocation3]] %s8
  $region1: #{tpu_custom_call.1} parent=0
    #allocation4 [shape = 'u8[16384]{0}', space=vmem, size = 0x4000, scoped, tag = 'input window, operand 5, single buffered']
    #allocation5 [shape = 's32[1]{0}', space=sflag, size = 0x4, scoped, tag = 'scoped memory for tpu_custom_call.1']
    %15 = vsyncpa [#allocation5], 0
    // Predicated region
    $region2: #{tpu_custom_call.1} parent=1 // pred_check
      _
    $region3: #{tpu_custom_call.1} parent=1 // pred_check_branch
      %17 = sbr.rel (0) target = $region5
    $region4: #{tpu_custom_call.1} parent=1 // pred_region
      _
    $region5: #{tpu_custom_call.1} parent=1 // pred_fallthru
      _
    // Predicated region
    $region6: #{tpu_custom_call.1} parent=1 // pred_check
      _
    $region7: #{tpu_custom_call.1} parent=1 // pred_check_branch
      %19 = sbr.rel (0) target = $region9
    $region8: #{tpu_custom_call.1} parent=1 // pred_region
      _
    $region9: #{tpu_custom_call.1} parent=1 // pred_fallthru
      _
    // Predicated region
    $region10: #{tpu_custom_call.1} parent=1 // pred_check
      _
    $region11: #{tpu_custom_call.1} parent=1 // pred_check_branch
      %21 = sbr.rel (0) target = $region13
    $region12: #{tpu_custom_call.1} parent=1 // pred_region
      _
    $region13: #{tpu_custom_call.1} parent=1 // pred_fallthru
      _
    // Predicated region
    $region14: #{tpu_custom_call.1} parent=1 // pred_check
      _
    $region15: #{tpu_custom_call.1} parent=1 // pred_check_branch
      %23 = sbr.rel (0) target = $region17
    $region16: #{tpu_custom_call.1} parent=1 // pred_region
      _
    $region17: #{tpu_custom_call.1} parent=1 // pred_fallthru
      _
    // Predicated region
    $region18: #{tpu_custom_call.1} parent=1 // pred_check
      _
    $region19: #{tpu_custom_call.1} parent=1 // pred_check_branch
      %25 = sbr.rel (0) target = $region21
    $region20: #{tpu_custom_call.1} parent=1 // pred_region
      _
    $region21: #{tpu_custom_call.1} parent=1 // pred_fallthru
      _
    // Predicated region
    $region22: #{tpu_custom_call.1} parent=1 // pred_check
      _
    $region23: #{tpu_custom_call.1} parent=1 // pred_check_branch
      %27 = sbr.rel (0) target = $region25
    $region24: #{tpu_custom_call.1} parent=1 // pred_region
      %s29 = ssub.s32 512, 512
      %30 = vsyncadd [#allocation5], %s29
      %s31 = sshll.u32 [#allocation4], 4
      %s32 = int_to_ptr.vmem [resolvable:$true] %s31
      %37 = dma.hbm_to_vmem [thread:$0]  %s5, 512, %s32, [#allocation5], 128, 128, 8
    $region25: #{tpu_custom_call.1} parent=1 // pred_fallthru
      _
    // Predicated region
    $region26: #{tpu_custom_call.1} parent=1 // pred_check
      _
    $region27: #{tpu_custom_call.1} parent=1 // pred_check_branch
      %39 = sbr.rel (0) target = $region29
    $region28: #{tpu_custom_call.1} parent=1 // pred_region
      _
    $region29: #{tpu_custom_call.1} parent=1 // pred_fallthru
      _
    // Predicated region
    $region30: #{tpu_custom_call.1} parent=1 // pred_check
      _
    $region31: #{tpu_custom_call.1} parent=1 // pred_check_branch
      %41 = sbr.rel (0) target = $region33
    $region32: #{tpu_custom_call.1} parent=1 // pred_region
      _
    $region33: #{tpu_custom_call.1} parent=1 // pred_fallthru
      _
    // Predicated region
    $region34: #{tpu_custom_call.1} parent=1 // pred_check
      _
    $region35: #{tpu_custom_call.1} parent=1 // pred_check_branch
      %43 = sbr.rel (0) target = $region37
    $region36: #{tpu_custom_call.1} parent=1 // pred_region
      _
    $region37: #{tpu_custom_call.1} parent=1 // pred_fallthru
      _
    // Predicated region
    $region38: #{tpu_custom_call.1} parent=1 // pred_check
      _
    $region39: #{tpu_custom_call.1} parent=1 // pred_check_branch
      %45 = sbr.rel (0) target = $region41
    $region40: #{tpu_custom_call.1} parent=1 // pred_region
      %46 = dma.done [#allocation5], 512
    $region41: #{tpu_custom_call.1} parent=1 // pred_fallthru
      _
    %v47 = vld [vmem:[%s1] sm:$0xf]
    %v48 = vld [vmem:[%s4] sm:$0xff]
    %v49 = vld [vmem:[%s4 + $0x8] sm:$0xff]
    %v50 = vld [vmem:[%s4 + $0x10] sm:$0xff]
    %v51 = vld [vmem:[%s4 + $0x18] sm:$0xff]
    %v52 = vld [vmem:[%s2] sm:$0xff]
    %v53 = vld [vmem:[%s2 + $0x8] sm:$0xff]
    %v54 = vld [vmem:[%s2 + $0x10] sm:$0xff]
    %v55 = vld [vmem:[%s2 + $0x18] sm:$0xff]
    %v56 = vld [vmem:[#allocation4] sm:$0xff]
    %v57 = vld [vmem:[#allocation4 + $0x8] sm:$0xff]
    %v58 = vld [vmem:[#allocation4 + $0x10] sm:$0xff]
    %v59 = vld [vmem:[#allocation4 + $0x18] sm:$0xff]
    %v60 = vld [vmem:[%s3] sm:$0x1]
    %v61 = vld [vmem:[%s6] sm:$0x1]
    %v62 = vld [vmem:[%s0] sm:$0xff]
    %v63 = vld [vmem:[%s0 + $0x8] sm:$0xff]
    %v64 = vld [vmem:[%s0 + $0x10] sm:$0xff]
    %v65 = vld [vmem:[%s0 + $0x18] sm:$0xff]
    %v66 = vld [vmem:[%s0 + $0x20] sm:$0xff]
    %v67 = vld [vmem:[%s0 + $0x28] sm:$0xff]
    %v68 = vld [vmem:[%s0 + $0x30] sm:$0xff]
    %v69 = vld [vmem:[%s0 + $0x38] sm:$0xff]
    %v71 = vlaneseq
    %v72 = vshrl.u32 %v71, 7
    %v73 = vsub.s32 0, %v72
    %v74 = vrot.slane %v60, %v73
    %vm76 = vcmask 31744
    %v78 = vsel %vm76, %v62, 0
    %v81 = vsel %vm76, %v63, 0
    %v84 = vsel %vm76, %v64, 0
    %v87 = vsel %vm76, %v65, 0
    %v90 = vsel %vm76, %v66, 0
    %v93 = vsel %vm76, %v67, 0
    %v96 = vsel %vm76, %v68, 0
    %v99 = vsel %vm76, %v69, 0
    %vm101 = vcmask 1043456
    %v103 = vsel %vm101, %v47, 0
    %105 = vmatprep.subr.mxu0 0.0
    %106 = vmatpush1.msra.mxu0 0.0
    %107 = vmatprep.subr.mxu0 0.0
    %108 = vmatpush1.msra.mxu0 0.0
    %109 = vmatprep.subr.mxu0 0.0
    %110 = vmatpush1.msra.mxu0 0.0
    %111 = vmatprep.subr.mxu0 0.0
    %112 = vmatpush1.msra.mxu0 0.0
    %113 = vmatprep.subr.mxu0 0.0
    %114 = vmatpush1.msra.mxu0 0.0
    %115 = vmatprep.subr.mxu0 0.0
    %116 = vmatpush1.msra.mxu0 0.0
    %117 = vmatprep.subr.mxu0 0.0
    %118 = vmatpush1.msra.mxu0 0.0
    %119 = vmatprep.subr.mxu0 0.0
    %120 = vmatpush1.msra.mxu0 0.0
    %121 = vmatprep.subr.mxu0 0.0
    %122 = vmatpush1.msra.mxu0 0.0
    %123 = vmatprep.subr.mxu0 0.0
    %124 = vmatpush1.msra.mxu0 0.0
    %125 = vmatprep.subr.mxu0 0.0
    %126 = vmatpush1.msra.mxu0 0.0
    %127 = vmatprep.subr.mxu0 0.0
    %128 = vmatpush1.msra.mxu0 0.0
    %129 = vmatprep.subr.mxu0 0.0
    %130 = vmatpush1.msra.mxu0 0.0
    %131 = vmatprep.subr.mxu0 0.0
    %132 = vmatpush1.msra.mxu0 0.0
    %133 = vmatprep.subr.mxu0 0.0
    %134 = vmatpush1.msra.mxu0 0.0
    %135 = vmatprep.subr.mxu0 0.0
    %136 = vmatpush1.msra.mxu0 %v103
    %137 = vmatprep.subr.mxu0 0.0
    %138 = vmatpush2.msra.mxu0 0.0
    %139 = vmatprep.subr.mxu0 0.0
    %140 = vmatpush2.msra.mxu0 0.0
    %141 = vmatprep.subr.mxu0 0.0
    %142 = vmatpush2.msra.mxu0 0.0
    %143 = vmatprep.subr.mxu0 0.0
    %144 = vmatpush2.msra.mxu0 0.0
    %145 = vmatprep.subr.mxu0 0.0
    %146 = vmatpush2.msra.mxu0 0.0
    %147 = vmatprep.subr.mxu0 0.0
    %148 = vmatpush2.msra.mxu0 0.0
    %149 = vmatprep.subr.mxu0 0.0
    %150 = vmatpush2.msra.mxu0 0.0
    %151 = vmatprep.subr.mxu0 0.0
    %152 = vmatpush2.msra.mxu0 0.0
    %153 = vmatprep.subr.mxu0 0.0
    %154 = vmatpush2.msra.mxu0 0.0
    %155 = vmatprep.subr.mxu0 0.0
    %156 = vmatpush2.msra.mxu0 0.0
    %157 = vmatprep.subr.mxu0 0.0
    %158 = vmatpush2.msra.mxu0 0.0
    %159 = vmatprep.subr.mxu0 0.0
    %160 = vmatpush2.msra.mxu0 0.0
    %161 = vmatprep.subr.mxu0 0.0
    %162 = vmatpush2.msra.mxu0 0.0
    %163 = vmatprep.subr.mxu0 0.0
    %164 = vmatpush2.msra.mxu0 0.0
    %165 = vmatprep.subr.mxu0 0.0
    %166 = vmatpush2.msra.mxu0 0.0
    %167 = vmatprep.subr.mxu0 0.0
    %168 = vmatpush2.msra.mxu0 0.0
    %169 = vmatprep.mubr.f32.mxu0 0.0
    %170 = vmatmul.mubr.f32.gmra.mxu0 %v78
    %v171 = vpop.f32.mrf.mxu0
    %v172 = vadd.f32 %v74, %v171
    %v173 = vpop.f32.mrf.mxu0
    %174 = vmatprep.mubr.f32.mxu0 0.0
    %175 = vmatmul.mubr.f32.gmra.mxu0 %v81
    %v176 = vpop.f32.mrf.mxu0
    %v177 = vadd.f32 %v74, %v176
    %v178 = vpop.f32.mrf.mxu0
    %179 = vmatprep.mubr.f32.mxu0 0.0
    %180 = vmatmul.mubr.f32.gmra.mxu0 %v84
    %v181 = vpop.f32.mrf.mxu0
    %v182 = vadd.f32 %v74, %v181
    %v183 = vpop.f32.mrf.mxu0
    %184 = vmatprep.mubr.f32.mxu0 0.0
    %185 = vmatmul.mubr.f32.gmra.mxu0 %v87
    %v186 = vpop.f32.mrf.mxu0
    %v187 = vadd.f32 %v74, %v186
    %v188 = vpop.f32.mrf.mxu0
    %189 = vmatprep.mubr.f32.mxu0 0.0
    %190 = vmatmul.mubr.f32.gmra.mxu0 %v90
    %v191 = vpop.f32.mrf.mxu0
    %v192 = vadd.f32 %v74, %v191
    %v193 = vpop.f32.mrf.mxu0
    %194 = vmatprep.mubr.f32.mxu0 0.0
    %195 = vmatmul.mubr.f32.gmra.mxu0 %v93
    %v196 = vpop.f32.mrf.mxu0
    %v197 = vadd.f32 %v74, %v196
    %v198 = vpop.f32.mrf.mxu0
    %199 = vmatprep.mubr.f32.mxu0 0.0
    %200 = vmatmul.mubr.f32.gmra.mxu0 %v96
    %v201 = vpop.f32.mrf.mxu0
    %v202 = vadd.f32 %v74, %v201
    %v203 = vpop.f32.mrf.mxu0
    %204 = vmatprep.mubr.f32.mxu0 0.0
    %205 = vmatmul.mubr.f32.gmra.mxu0 %v99
    %v206 = vpop.f32.mrf.mxu0
    %v207 = vadd.f32 %v74, %v206
    %v208 = vpop.f32.mrf.mxu0
    %209 = vdwg.mxu0
    %210 = vst [vmem:[#allocation2] sm:$0xff] %v172
    %211 = vst [vmem:[#allocation2 + $0x8] sm:$0xff] %v177
    %212 = vst [vmem:[#allocation2 + $0x10] sm:$0xff] %v182
    %213 = vst [vmem:[#allocation2 + $0x18] sm:$0xff] %v187
    %214 = vst [vmem:[#allocation2 + $0x20] sm:$0xff] %v192
    %215 = vst [vmem:[#allocation2 + $0x28] sm:$0xff] %v197
    %216 = vst [vmem:[#allocation2 + $0x30] sm:$0xff] %v202
    %217 = vst [vmem:[#allocation2 + $0x38] sm:$0xff] %v207
    %vm218 = vcmask 261120
    %v220 = vsel %vm218, 0.0, 0
    %222 = vmatprep.subr.mxu0 0.0
    %223 = vmatpush1.msra.mxu0 0.0
    %224 = vmatprep.subr.mxu0 0.0
    %225 = vmatpush1.msra.mxu0 0.0
    %226 = vmatprep.subr.mxu0 0.0
    %227 = vmatpush1.msra.mxu0 0.0
    %228 = vmatprep.subr.mxu0 0.0
    %229 = vmatpush1.msra.mxu0 0.0
    %230 = vmatprep.subr.mxu0 0.0
    %231 = vmatpush1.msra.mxu0 0.0
    %232 = vmatprep.subr.mxu0 0.0
    %233 = vmatpush1.msra.mxu0 0.0
    %234 = vmatprep.subr.mxu0 0.0
    %235 = vmatpush1.msra.mxu0 0.0
    %236 = vmatprep.subr.mxu0 0.0
    %237 = vmatpush1.msra.mxu0 0.0
    %238 = vmatprep.subr.mxu0 0.0
    %239 = vmatpush1.msra.mxu0 0.0
    %240 = vmatprep.subr.mxu0 0.0
    %241 = vmatpush1.msra.mxu0 0.0
    %242 = vmatprep.subr.mxu0 0.0
    %243 = vmatpush1.msra.mxu0 0.0
    %244 = vmatprep.subr.mxu0 0.0
    %245 = vmatpush1.msra.mxu0 0.0
    %246 = vmatprep.subr.mxu0 0.0
    %247 = vmatpush1.msra.mxu0 %v55
    %248 = vmatprep.subr.mxu0 0.0
    %249 = vmatpush1.msra.mxu0 %v54
    %250 = vmatprep.subr.mxu0 0.0
    %251 = vmatpush1.msra.mxu0 %v53
    %252 = vmatprep.subr.mxu0 0.0
    %253 = vmatpush1.msra.mxu0 %v52
    %254 = vmatprep.subr.mxu0 0.0
    %255 = vmatpush2.msra.mxu0 0.0
    %256 = vmatprep.subr.mxu0 0.0
    %257 = vmatpush2.msra.mxu0 0.0
    %258 = vmatprep.subr.mxu0 0.0
    %259 = vmatpush2.msra.mxu0 0.0
    %260 = vmatprep.subr.mxu0 0.0
    %261 = vmatpush2.msra.mxu0 0.0
    %262 = vmatprep.subr.mxu0 0.0
    %263 = vmatpush2.msra.mxu0 0.0
    %264 = vmatprep.subr.mxu0 0.0
    %265 = vmatpush2.msra.mxu0 0.0
    %266 = vmatprep.subr.mxu0 0.0
    %267 = vmatpush2.msra.mxu0 0.0
    %268 = vmatprep.subr.mxu0 0.0
    %269 = vmatpush2.msra.mxu0 0.0
    %270 = vmatprep.subr.mxu0 0.0
    %271 = vmatpush2.msra.mxu0 0.0
    %272 = vmatprep.subr.mxu0 0.0
    %273 = vmatpush2.msra.mxu0 0.0
    %274 = vmatprep.subr.mxu0 0.0
    %275 = vmatpush2.msra.mxu0 0.0
    %276 = vmatprep.subr.mxu0 0.0
    %277 = vmatpush2.msra.mxu0 0.0
    %278 = vmatprep.subr.mxu0 0.0
    %279 = vmatpush2.msra.mxu0 0.0
    %280 = vmatprep.subr.mxu0 0.0
    %281 = vmatpush2.msra.mxu0 0.0
    %282 = vmatprep.subr.mxu0 0.0
    %283 = vmatpush2.msra.mxu0 0.0
    %284 = vmatprep.subr.mxu0 0.0
    %285 = vmatpush2.msra.mxu0 0.0
    %286 = vmatprep.mubr.f32.mxu0 0.0
    %287 = vmatmul.mubr.f32.gmra.mxu0 %v220
    %v288 = vpop.f32.mrf.mxu0
    %v289 = vadd.f32 0.0, %v288
    %v290 = vpop.f32.mrf.mxu0
    %291 = vdwg.mxu0
    %v292 = vld [vmem:[#allocation2] sm:$0xff]
    %v293 = vadd.f32 %v292, %v289
    %v294 = vxor.u32 %v293, 2147483648
    %v295 = vmul.f32 %v294, 1.442695
    %v296 = vpow.pop %v295
    %v297 = vadd.f32 %v296, 1.0
    %v298 = vrcp.pop %v297
    %v299 = vmul.f32 1.0, %v298
    %v300 = vmul.f32 %v299, 2.0
    %v301 = vsub.f32 %v300, 1.0
    %v302 = vmul.f32 %v299, 0.0
    %304 = vrot.lane.b32.xlu0 %v301, 64
    %v305 = vpop.permute.xlu0 %304
    %v307 = vmul.f32 %v299, %v305
    %309 = vrot.lane.b32.xlu0 %v307, 32
    %v310 = vpop.permute.xlu0 %309
    %v312 = vadd.f32 %v302, %v310
    %v313 = vtanh.pop %v312
    %315 = vrot.lane.b32.xlu0 %v313, 64
    %v316 = vpop.permute.xlu0 %315
    %v318 = vmul.f32 %v299, %v316
    %320 = vrot.lane.b32.xlu0 %v318, 32
    %v321 = vpop.permute.xlu0 %320
    %v322 = vsel %vm218, %v321, 0
    %324 = vmatprep.subr.mxu0 0.0
    %325 = vmatpush1.msra.mxu0 0.0
    %326 = vmatprep.subr.mxu0 0.0
    %327 = vmatpush1.msra.mxu0 0.0
    %328 = vmatprep.subr.mxu0 0.0
    %329 = vmatpush1.msra.mxu0 0.0
    %330 = vmatprep.subr.mxu0 0.0
    %331 = vmatpush1.msra.mxu0 0.0
    %332 = vmatprep.subr.mxu0 0.0
    %333 = vmatpush1.msra.mxu0 0.0
    %334 = vmatprep.subr.mxu0 0.0
    %335 = vmatpush1.msra.mxu0 0.0
    %336 = vmatprep.subr.mxu0 0.0
    %337 = vmatpush1.msra.mxu0 0.0
    %338 = vmatprep.subr.mxu0 0.0
    %339 = vmatpush1.msra.mxu0 0.0
    %340 = vmatprep.subr.mxu0 0.0
    %341 = vmatpush1.msra.mxu0 0.0
    %342 = vmatprep.subr.mxu0 0.0
    %343 = vmatpush1.msra.mxu0 0.0
    %344 = vmatprep.subr.mxu0 0.0
    %345 = vmatpush1.msra.mxu0 0.0
    %346 = vmatprep.subr.mxu0 0.0
    %347 = vmatpush1.msra.mxu0 0.0
    %348 = vmatprep.subr.mxu0 0.0
    %349 = vmatpush1.msra.mxu0 %v55
    %350 = vmatprep.subr.mxu0 0.0
    %351 = vmatpush1.msra.mxu0 %v54
    %352 = vmatprep.subr.mxu0 0.0
    %353 = vmatpush1.msra.mxu0 %v53
    %354 = vmatprep.subr.mxu0 0.0
    %355 = vmatpush1.msra.mxu0 %v52
    %356 = vmatprep.subr.mxu0 0.0
    %357 = vmatpush2.msra.mxu0 0.0
    %358 = vmatprep.subr.mxu0 0.0
    %359 = vmatpush2.msra.mxu0 0.0
    %360 = vmatprep.subr.mxu0 0.0
    %361 = vmatpush2.msra.mxu0 0.0
    %362 = vmatprep.subr.mxu0 0.0
    %363 = vmatpush2.msra.mxu0 0.0
    %364 = vmatprep.subr.mxu0 0.0
    %365 = vmatpush2.msra.mxu0 0.0
    %366 = vmatprep.subr.mxu0 0.0
    %367 = vmatpush2.msra.mxu0 0.0
    %368 = vmatprep.subr.mxu0 0.0
    %369 = vmatpush2.msra.mxu0 0.0
    %370 = vmatprep.subr.mxu0 0.0
    %371 = vmatpush2.msra.mxu0 0.0
    %372 = vmatprep.subr.mxu0 0.0
    %373 = vmatpush2.msra.mxu0 0.0
    %374 = vmatprep.subr.mxu0 0.0
    %375 = vmatpush2.msra.mxu0 0.0
    %376 = vmatprep.subr.mxu0 0.0
    %377 = vmatpush2.msra.mxu0 0.0
    %378 = vmatprep.subr.mxu0 0.0
    %379 = vmatpush2.msra.mxu0 0.0
    %380 = vmatprep.subr.mxu0 0.0
    %381 = vmatpush2.msra.mxu0 0.0
    %382 = vmatprep.subr.mxu0 0.0
    %383 = vmatpush2.msra.mxu0 0.0
    %384 = vmatprep.subr.mxu0 0.0
    %385 = vmatpush2.msra.mxu0 0.0
    %386 = vmatprep.subr.mxu0 0.0
    %387 = vmatpush2.msra.mxu0 0.0
    %388 = vmatprep.mubr.f32.mxu0 0.0
    %389 = vmatmul.mubr.f32.gmra.mxu0 %v322
    %v390 = vpop.f32.mrf.mxu0
    %v391 = vadd.f32 0.0, %v390
    %v392 = vpop.f32.mrf.mxu0
    %393 = vdwg.mxu0
    %v394 = vld [vmem:[#allocation2 + $0x8] sm:$0xff]
    %v395 = vadd.f32 %v394, %v391
    %v396 = vxor.u32 %v395, 2147483648
    %v397 = vmul.f32 %v396, 1.442695
    %v398 = vpow.pop %v397
    %v399 = vadd.f32 %v398, 1.0
    %v400 = vrcp.pop %v399
    %v401 = vmul.f32 1.0, %v400
    %v402 = vmul.f32 %v401, 2.0
    %v403 = vsub.f32 %v402, 1.0
    %v404 = vmul.f32 %v401, %v312
    %406 = vrot.lane.b32.xlu0 %v403, 64
    %v407 = vpop.permute.xlu0 %406
    %v409 = vmul.f32 %v401, %v407
    %411 = vrot.lane.b32.xlu0 %v409, 32
    %v412 = vpop.permute.xlu0 %411
    %v414 = vadd.f32 %v404, %v412
    %v415 = vtanh.pop %v414
    %417 = vrot.lane.b32.xlu0 %v415, 64
    %v418 = vpop.permute.xlu0 %417
    %v420 = vmul.f32 %v401, %v418
    %421 = vmatprep.subr.mxu0 0.0
    %422 = vmatpush1.msra.mxu0 0.0
    %423 = vmatprep.subr.mxu0 0.0
    %424 = vmatpush1.msra.mxu0 0.0
    %425 = vmatprep.subr.mxu0 0.0
    %426 = vmatpush1.msra.mxu0 0.0
    %427 = vmatprep.subr.mxu0 0.0
    %428 = vmatpush1.msra.mxu0 0.0
    %429 = vmatprep.subr.mxu0 0.0
    %430 = vmatpush1.msra.mxu0 0.0
    %431 = vmatprep.subr.mxu0 0.0
    %432 = vmatpush1.msra.mxu0 0.0
    %433 = vmatprep.subr.mxu0 0.0
    %434 = vmatpush1.msra.mxu0 0.0
    %435 = vmatprep.subr.mxu0 0.0
    %436 = vmatpush1.msra.mxu0 0.0
    %437 = vmatprep.subr.mxu0 0.0
    %438 = vmatpush1.msra.mxu0 0.0
    %439 = vmatprep.subr.mxu0 0.0
    %440 = vmatpush1.msra.mxu0 0.0
    %441 = vmatprep.subr.mxu0 0.0
    %442 = vmatpush1.msra.mxu0 0.0
    %443 = vmatprep.subr.mxu0 0.0
    %444 = vmatpush1.msra.mxu0 0.0
    %445 = vmatprep.subr.mxu0 0.0
    %446 = vmatpush1.msra.mxu0 %v59
    %447 = vmatprep.subr.mxu0 0.0
    %448 = vmatpush1.msra.mxu0 %v58
    %449 = vmatprep.subr.mxu0 0.0
    %450 = vmatpush1.msra.mxu0 %v57
    %451 = vmatprep.subr.mxu0 0.0
    %452 = vmatpush1.msra.mxu0 %v56
    %453 = vmatprep.subr.mxu0 0.0
    %454 = vmatpush2.msra.mxu0 0.0
    %455 = vmatprep.subr.mxu0 0.0
    %456 = vmatpush2.msra.mxu0 0.0
    %457 = vmatprep.subr.mxu0 0.0
    %458 = vmatpush2.msra.mxu0 0.0
    %459 = vmatprep.subr.mxu0 0.0
    %460 = vmatpush2.msra.mxu0 0.0
    %461 = vmatprep.subr.mxu0 0.0
    %462 = vmatpush2.msra.mxu0 0.0
    %463 = vmatprep.subr.mxu0 0.0
    %464 = vmatpush2.msra.mxu0 0.0
    %465 = vmatprep.subr.mxu0 0.0
    %466 = vmatpush2.msra.mxu0 0.0
    %467 = vmatprep.subr.mxu0 0.0
    %468 = vmatpush2.msra.mxu0 0.0
    %469 = vmatprep.subr.mxu0 0.0
    %470 = vmatpush2.msra.mxu0 0.0
    %471 = vmatprep.subr.mxu0 0.0
    %472 = vmatpush2.msra.mxu0 0.0
    %473 = vmatprep.subr.mxu0 0.0
    %474 = vmatpush2.msra.mxu0 0.0
    %475 = vmatprep.subr.mxu0 0.0
    %476 = vmatpush2.msra.mxu0 0.0
    %477 = vmatprep.subr.mxu0 0.0
    %478 = vmatpush2.msra.mxu0 0.0
    %479 = vmatprep.subr.mxu0 0.0
    %480 = vmatpush2.msra.mxu0 0.0
    %481 = vmatprep.subr.mxu0 0.0
    %482 = vmatpush2.msra.mxu0 0.0
    %483 = vmatprep.subr.mxu0 0.0
    %484 = vmatpush2.msra.mxu0 0.0
    %485 = vmatprep.mubr.f32.mxu0 0.0
    %486 = vmatmul.mubr.f32.gmra.mxu0 %v220
    %v487 = vpop.f32.mrf.mxu0
    %v488 = vadd.f32 0.0, %v487
    %v489 = vpop.f32.mrf.mxu0
    %490 = vdwg.mxu0
    %491 = vmatprep.subr.mxu0 0.0
    %492 = vmatpush1.msra.mxu0 0.0
    %493 = vmatprep.subr.mxu0 0.0
    %494 = vmatpush1.msra.mxu0 0.0
    %495 = vmatprep.subr.mxu0 0.0
    %496 = vmatpush1.msra.mxu0 0.0
    %497 = vmatprep.subr.mxu0 0.0
    %498 = vmatpush1.msra.mxu0 0.0
    %499 = vmatprep.subr.mxu0 0.0
    %500 = vmatpush1.msra.mxu0 0.0
    %501 = vmatprep.subr.mxu0 0.0
    %502 = vmatpush1.msra.mxu0 0.0
    %503 = vmatprep.subr.mxu0 0.0
    %504 = vmatpush1.msra.mxu0 0.0
    %505 = vmatprep.subr.mxu0 0.0
    %506 = vmatpush1.msra.mxu0 0.0
    %507 = vmatprep.subr.mxu0 0.0
    %508 = vmatpush1.msra.mxu0 0.0
    %509 = vmatprep.subr.mxu0 0.0
    %510 = vmatpush1.msra.mxu0 0.0
    %511 = vmatprep.subr.mxu0 0.0
    %512 = vmatpush1.msra.mxu0 0.0
    %513 = vmatprep.subr.mxu0 0.0
    %514 = vmatpush1.msra.mxu0 0.0
    %515 = vmatprep.subr.mxu0 0.0
    %516 = vmatpush1.msra.mxu0 %v51
    %517 = vmatprep.subr.mxu0 0.0
    %518 = vmatpush1.msra.mxu0 %v50
    %519 = vmatprep.subr.mxu0 0.0
    %520 = vmatpush1.msra.mxu0 %v49
    %521 = vmatprep.subr.mxu0 0.0
    %522 = vmatpush1.msra.mxu0 %v48
    %523 = vmatprep.subr.mxu0 0.0
    %524 = vmatpush2.msra.mxu0 0.0
    %525 = vmatprep.subr.mxu0 0.0
    %526 = vmatpush2.msra.mxu0 0.0
    %527 = vmatprep.subr.mxu0 0.0
    %528 = vmatpush2.msra.mxu0 0.0
    %529 = vmatprep.subr.mxu0 0.0
    %530 = vmatpush2.msra.mxu0 0.0
    %531 = vmatprep.subr.mxu0 0.0
    %532 = vmatpush2.msra.mxu0 0.0
    %533 = vmatprep.subr.mxu0 0.0
    %534 = vmatpush2.msra.mxu0 0.0
    %535 = vmatprep.subr.mxu0 0.0
    %536 = vmatpush2.msra.mxu0 0.0
    %537 = vmatprep.subr.mxu0 0.0
    %538 = vmatpush2.msra.mxu0 0.0
    %539 = vmatprep.subr.mxu0 0.0
    %540 = vmatpush2.msra.mxu0 0.0
    %541 = vmatprep.subr.mxu0 0.0
    %542 = vmatpush2.msra.mxu0 0.0
    %543 = vmatprep.subr.mxu0 0.0
    %544 = vmatpush2.msra.mxu0 0.0
    %545 = vmatprep.subr.mxu0 0.0
    %546 = vmatpush2.msra.mxu0 0.0
    %547 = vmatprep.subr.mxu0 0.0
    %548 = vmatpush2.msra.mxu0 0.0
    %549 = vmatprep.subr.mxu0 0.0
    %550 = vmatpush2.msra.mxu0 0.0
    %551 = vmatprep.subr.mxu0 0.0
    %552 = vmatpush2.msra.mxu0 0.0
    %553 = vmatprep.subr.mxu0 0.0
    %554 = vmatpush2.msra.mxu0 0.0
    %555 = vmatprep.mubr.f32.mxu0 0.0
    %556 = vmatmul.mubr.f32.gmra.mxu0 %v322
    %v557 = vpop.f32.mrf.mxu0
    %v558 = vadd.f32 %v488, %v557
    %v559 = vpop.f32.mrf.mxu0
    %560 = vdwg.mxu0
    %v562 = vlaneseq
    %v563 = vshrl.u32 %v562, 7
    %v564 = vsub.s32 0, %v563
    %v565 = vrot.slane %v61, %v564
    %v567 = vadd.f32 %v558, %v565
    %v568 = vxor.u32 %v567, 2147483648
    %v569 = vmul.f32 %v568, 1.442695
    %v570 = vpow.pop %v569
    %v571 = vadd.f32 %v570, 1.0
    %v572 = vrcp.pop %v571
    %v573 = vmul.f32 1.0, %v572
    %v574 = vmul.f32 %v573, 2.0
    %v575 = vsub.f32 %v574, 1.0
    %v576 = vmul.f32 %v573, 0.0
    %578 = vrot.lane.b32.xlu0 %v575, 64
    %v579 = vpop.permute.xlu0 %578
    %v581 = vmul.f32 %v573, %v579
    %583 = vrot.lane.b32.xlu0 %v581, 32
    %v584 = vpop.permute.xlu0 %583
    %v586 = vadd.f32 %v576, %v584
    %v587 = vtanh.pop %v586
    %589 = vrot.lane.b32.xlu0 %v587, 64
    %v590 = vpop.permute.xlu0 %589
    %v592 = vmul.f32 %v573, %v590
    %594 = vrot.lane.b32.xlu0 %v420, 32
    %v595 = vpop.permute.xlu0 %594
    %v596 = vsel %vm218, %v595, 0
    %598 = vmatprep.subr.mxu0 0.0
    %599 = vmatpush1.msra.mxu0 0.0
    %600 = vmatprep.subr.mxu0 0.0
    %601 = vmatpush1.msra.mxu0 0.0
    %602 = vmatprep.subr.mxu0 0.0
    %603 = vmatpush1.msra.mxu0 0.0
    %604 = vmatprep.subr.mxu0 0.0
    %605 = vmatpush1.msra.mxu0 0.0
    %606 = vmatprep.subr.mxu0 0.0
    %607 = vmatpush1.msra.mxu0 0.0
    %608 = vmatprep.subr.mxu0 0.0
    %609 = vmatpush1.msra.mxu0 0.0
    %610 = vmatprep.subr.mxu0 0.0
    %611 = vmatpush1.msra.mxu0 0.0
    %612 = vmatprep.subr.mxu0 0.0
    %613 = vmatpush1.msra.mxu0 0.0
    %614 = vmatprep.subr.mxu0 0.0
    %615 = vmatpush1.msra.mxu0 0.0
    %616 = vmatprep.subr.mxu0 0.0
    %617 = vmatpush1.msra.mxu0 0.0
    %618 = vmatprep.subr.mxu0 0.0
    %619 = vmatpush1.msra.mxu0 0.0
    %620 = vmatprep.subr.mxu0 0.0
    %621 = vmatpush1.msra.mxu0 0.0
    %622 = vmatprep.subr.mxu0 0.0
    %623 = vmatpush1.msra.mxu0 %v55
    %624 = vmatprep.subr.mxu0 0.0
    %625 = vmatpush1.msra.mxu0 %v54
    %626 = vmatprep.subr.mxu0 0.0
    %627 = vmatpush1.msra.mxu0 %v53
    %628 = vmatprep.subr.mxu0 0.0
    %629 = vmatpush1.msra.mxu0 %v52
    %630 = vmatprep.subr.mxu0 0.0
    %631 = vmatpush2.msra.mxu0 0.0
    %632 = vmatprep.subr.mxu0 0.0
    %633 = vmatpush2.msra.mxu0 0.0
    %634 = vmatprep.subr.mxu0 0.0
    %635 = vmatpush2.msra.mxu0 0.0
    %636 = vmatprep.subr.mxu0 0.0
    %637 = vmatpush2.msra.mxu0 0.0
    %638 = vmatprep.subr.mxu0 0.0
    %639 = vmatpush2.msra.mxu0 0.0
    %640 = vmatprep.subr.mxu0 0.0
    %641 = vmatpush2.msra.mxu0 0.0
    %642 = vmatprep.subr.mxu0 0.0
    %643 = vmatpush2.msra.mxu0 0.0
    %644 = vmatprep.subr.mxu0 0.0
    %645 = vmatpush2.msra.mxu0 0.0
    %646 = vmatprep.subr.mxu0 0.0
    %647 = vmatpush2.msra.mxu0 0.0
    %648 = vmatprep.subr.mxu0 0.0
    %649 = vmatpush2.msra.mxu0 0.0
    %650 = vmatprep.subr.mxu0 0.0
    %651 = vmatpush2.msra.mxu0 0.0
    %652 = vmatprep.subr.mxu0 0.0
    %653 = vmatpush2.msra.mxu0 0.0
    %654 = vmatprep.subr.mxu0 0.0
    %655 = vmatpush2.msra.mxu0 0.0
    %656 = vmatprep.subr.mxu0 0.0
    %657 = vmatpush2.msra.mxu0 0.0
    %658 = vmatprep.subr.mxu0 0.0
    %659 = vmatpush2.msra.mxu0 0.0
    %660 = vmatprep.subr.mxu0 0.0
    %661 = vmatpush2.msra.mxu0 0.0
    %662 = vmatprep.mubr.f32.mxu0 0.0
    %663 = vmatmul.mubr.f32.gmra.mxu0 %v596
    %v664 = vpop.f32.mrf.mxu0
    %v665 = vadd.f32 0.0, %v664
    %v666 = vpop.f32.mrf.mxu0
    %667 = vdwg.mxu0
    %v668 = vld [vmem:[#allocation2 + $0x10] sm:$0xff]
    %v669 = vadd.f32 %v668, %v665
    %v670 = vxor.u32 %v669, 2147483648
    %v671 = vmul.f32 %v670, 1.442695
    %v672 = vpow.pop %v671
    %v673 = vadd.f32 %v672, 1.0
    %v674 = vrcp.pop %v673
    %v675 = vmul.f32 1.0, %v674
    %v676 = vmul.f32 %v675, 2.0
    %v677 = vsub.f32 %v676, 1.0
    %v678 = vmul.f32 %v675, %v414
    %680 = vrot.lane.b32.xlu0 %v677, 64
    %v681 = vpop.permute.xlu0 %680
    %v683 = vmul.f32 %v675, %v681
    %685 = vrot.lane.b32.xlu0 %v683, 32
    %v686 = vpop.permute.xlu0 %685
    %v688 = vadd.f32 %v678, %v686
    %v689 = vtanh.pop %v688
    %691 = vrot.lane.b32.xlu0 %v689, 64
    %v692 = vpop.permute.xlu0 %691
    %v694 = vmul.f32 %v675, %v692
    %696 = vrot.lane.b32.xlu0 %v592, 32
    %v697 = vpop.permute.xlu0 %696
    %v698 = vsel %vm218, %v697, 0
    %700 = vmatprep.subr.mxu0 0.0
    %701 = vmatpush1.msra.mxu0 0.0
    %702 = vmatprep.subr.mxu0 0.0
    %703 = vmatpush1.msra.mxu0 0.0
    %704 = vmatprep.subr.mxu0 0.0
    %705 = vmatpush1.msra.mxu0 0.0
    %706 = vmatprep.subr.mxu0 0.0
    %707 = vmatpush1.msra.mxu0 0.0
    %708 = vmatprep.subr.mxu0 0.0
    %709 = vmatpush1.msra.mxu0 0.0
    %710 = vmatprep.subr.mxu0 0.0
    %711 = vmatpush1.msra.mxu0 0.0
    %712 = vmatprep.subr.mxu0 0.0
    %713 = vmatpush1.msra.mxu0 0.0
    %714 = vmatprep.subr.mxu0 0.0
    %715 = vmatpush1.msra.mxu0 0.0
    %716 = vmatprep.subr.mxu0 0.0
    %717 = vmatpush1.msra.mxu0 0.0
    %718 = vmatprep.subr.mxu0 0.0
    %719 = vmatpush1.msra.mxu0 0.0
    %720 = vmatprep.subr.mxu0 0.0
    %721 = vmatpush1.msra.mxu0 0.0
    %722 = vmatprep.subr.mxu0 0.0
    %723 = vmatpush1.msra.mxu0 0.0
    %724 = vmatprep.subr.mxu0 0.0
    %725 = vmatpush1.msra.mxu0 %v59
    %726 = vmatprep.subr.mxu0 0.0
    %727 = vmatpush1.msra.mxu0 %v58
    %728 = vmatprep.subr.mxu0 0.0
    %729 = vmatpush1.msra.mxu0 %v57
    %730 = vmatprep.subr.mxu0 0.0
    %731 = vmatpush1.msra.mxu0 %v56
    %732 = vmatprep.subr.mxu0 0.0
    %733 = vmatpush2.msra.mxu0 0.0
    %734 = vmatprep.subr.mxu0 0.0
    %735 = vmatpush2.msra.mxu0 0.0
    %736 = vmatprep.subr.mxu0 0.0
    %737 = vmatpush2.msra.mxu0 0.0
    %738 = vmatprep.subr.mxu0 0.0
    %739 = vmatpush2.msra.mxu0 0.0
    %740 = vmatprep.subr.mxu0 0.0
    %741 = vmatpush2.msra.mxu0 0.0
    %742 = vmatprep.subr.mxu0 0.0
    %743 = vmatpush2.msra.mxu0 0.0
    %744 = vmatprep.subr.mxu0 0.0
    %745 = vmatpush2.msra.mxu0 0.0
    %746 = vmatprep.subr.mxu0 0.0
    %747 = vmatpush2.msra.mxu0 0.0
    %748 = vmatprep.subr.mxu0 0.0
    %749 = vmatpush2.msra.mxu0 0.0
    %750 = vmatprep.subr.mxu0 0.0
    %751 = vmatpush2.msra.mxu0 0.0
    %752 = vmatprep.subr.mxu0 0.0
    %753 = vmatpush2.msra.mxu0 0.0
    %754 = vmatprep.subr.mxu0 0.0
    %755 = vmatpush2.msra.mxu0 0.0
    %756 = vmatprep.subr.mxu0 0.0
    %757 = vmatpush2.msra.mxu0 0.0
    %758 = vmatprep.subr.mxu0 0.0
    %759 = vmatpush2.msra.mxu0 0.0
    %760 = vmatprep.subr.mxu0 0.0
    %761 = vmatpush2.msra.mxu0 0.0
    %762 = vmatprep.subr.mxu0 0.0
    %763 = vmatpush2.msra.mxu0 0.0
    %764 = vmatprep.mubr.f32.mxu0 0.0
    %765 = vmatmul.mubr.f32.gmra.mxu0 %v698
    %v766 = vpop.f32.mrf.mxu0
    %v767 = vadd.f32 0.0, %v766
    %v768 = vpop.f32.mrf.mxu0
    %769 = vdwg.mxu0
    %770 = vmatprep.subr.mxu0 0.0
    %771 = vmatpush1.msra.mxu0 0.0
    %772 = vmatprep.subr.mxu0 0.0
    %773 = vmatpush1.msra.mxu0 0.0
    %774 = vmatprep.subr.mxu0 0.0
    %775 = vmatpush1.msra.mxu0 0.0
    %776 = vmatprep.subr.mxu0 0.0
    %777 = vmatpush1.msra.mxu0 0.0
    %778 = vmatprep.subr.mxu0 0.0
    %779 = vmatpush1.msra.mxu0 0.0
    %780 = vmatprep.subr.mxu0 0.0
    %781 = vmatpush1.msra.mxu0 0.0
    %782 = vmatprep.subr.mxu0 0.0
    %783 = vmatpush1.msra.mxu0 0.0
    %784 = vmatprep.subr.mxu0 0.0
    %785 = vmatpush1.msra.mxu0 0.0
    %786 = vmatprep.subr.mxu0 0.0
    %787 = vmatpush1.msra.mxu0 0.0
    %788 = vmatprep.subr.mxu0 0.0
    %789 = vmatpush1.msra.mxu0 0.0
    %790 = vmatprep.subr.mxu0 0.0
    %791 = vmatpush1.msra.mxu0 0.0
    %792 = vmatprep.subr.mxu0 0.0
    %793 = vmatpush1.msra.mxu0 0.0
    %794 = vmatprep.subr.mxu0 0.0
    %795 = vmatpush1.msra.mxu0 %v51
    %796 = vmatprep.subr.mxu0 0.0
    %797 = vmatpush1.msra.mxu0 %v50
    %798 = vmatprep.subr.mxu0 0.0
    %799 = vmatpush1.msra.mxu0 %v49
    %800 = vmatprep.subr.mxu0 0.0
    %801 = vmatpush1.msra.mxu0 %v48
    %802 = vmatprep.subr.mxu0 0.0
    %803 = vmatpush2.msra.mxu0 0.0
    %804 = vmatprep.subr.mxu0 0.0
    %805 = vmatpush2.msra.mxu0 0.0
    %806 = vmatprep.subr.mxu0 0.0
    %807 = vmatpush2.msra.mxu0 0.0
    %808 = vmatprep.subr.mxu0 0.0
    %809 = vmatpush2.msra.mxu0 0.0
    %810 = vmatprep.subr.mxu0 0.0
    %811 = vmatpush2.msra.mxu0 0.0
    %812 = vmatprep.subr.mxu0 0.0
    %813 = vmatpush2.msra.mxu0 0.0
    %814 = vmatprep.subr.mxu0 0.0
    %815 = vmatpush2.msra.mxu0 0.0
    %816 = vmatprep.subr.mxu0 0.0
    %817 = vmatpush2.msra.mxu0 0.0
    %818 = vmatprep.subr.mxu0 0.0
    %819 = vmatpush2.msra.mxu0 0.0
    %820 = vmatprep.subr.mxu0 0.0
    %821 = vmatpush2.msra.mxu0 0.0
    %822 = vmatprep.subr.mxu0 0.0
    %823 = vmatpush2.msra.mxu0 0.0
    %824 = vmatprep.subr.mxu0 0.0
    %825 = vmatpush2.msra.mxu0 0.0
    %826 = vmatprep.subr.mxu0 0.0
    %827 = vmatpush2.msra.mxu0 0.0
    %828 = vmatprep.subr.mxu0 0.0
    %829 = vmatpush2.msra.mxu0 0.0
    %830 = vmatprep.subr.mxu0 0.0
    %831 = vmatpush2.msra.mxu0 0.0
    %832 = vmatprep.subr.mxu0 0.0
    %833 = vmatpush2.msra.mxu0 0.0
    %834 = vmatprep.mubr.f32.mxu0 0.0
    %835 = vmatmul.mubr.f32.gmra.mxu0 %v596
    %v836 = vpop.f32.mrf.mxu0
    %v837 = vadd.f32 %v767, %v836
    %v838 = vpop.f32.mrf.mxu0
    %839 = vdwg.mxu0
    %v840 = vadd.f32 %v837, %v565
    %v841 = vxor.u32 %v840, 2147483648
    %v842 = vmul.f32 %v841, 1.442695
    %v843 = vpow.pop %v842
    %v844 = vadd.f32 %v843, 1.0
    %v845 = vrcp.pop %v844
    %v846 = vmul.f32 1.0, %v845
    %v847 = vmul.f32 %v846, 2.0
    %v848 = vsub.f32 %v847, 1.0
    %v849 = vmul.f32 %v846, %v586
    %851 = vrot.lane.b32.xlu0 %v848, 64
    %v852 = vpop.permute.xlu0 %851
    %v854 = vmul.f32 %v846, %v852
    %856 = vrot.lane.b32.xlu0 %v854, 32
    %v857 = vpop.permute.xlu0 %856
    %v859 = vadd.f32 %v849, %v857
    %v860 = vtanh.pop %v859
    %862 = vrot.lane.b32.xlu0 %v860, 64
    %v863 = vpop.permute.xlu0 %862
    %v865 = vmul.f32 %v846, %v863
    %867 = vrot.lane.b32.xlu0 %v694, 32
    %v868 = vpop.permute.xlu0 %867
    %v869 = vsel %vm218, %v868, 0
    %871 = vmatprep.subr.mxu0 0.0
    %872 = vmatpush1.msra.mxu0 0.0
    %873 = vmatprep.subr.mxu0 0.0
    %874 = vmatpush1.msra.mxu0 0.0
    %875 = vmatprep.subr.mxu0 0.0
    %876 = vmatpush1.msra.mxu0 0.0
    %877 = vmatprep.subr.mxu0 0.0
    %878 = vmatpush1.msra.mxu0 0.0
    %879 = vmatprep.subr.mxu0 0.0
    %880 = vmatpush1.msra.mxu0 0.0
    %881 = vmatprep.subr.mxu0 0.0
    %882 = vmatpush1.msra.mxu0 0.0
    %883 = vmatprep.subr.mxu0 0.0
    %884 = vmatpush1.msra.mxu0 0.0
    %885 = vmatprep.subr.mxu0 0.0
    %886 = vmatpush1.msra.mxu0 0.0
    %887 = vmatprep.subr.mxu0 0.0
    %888 = vmatpush1.msra.mxu0 0.0
    %889 = vmatprep.subr.mxu0 0.0
    %890 = vmatpush1.msra.mxu0 0.0
    %891 = vmatprep.subr.mxu0 0.0
    %892 = vmatpush1.msra.mxu0 0.0
    %893 = vmatprep.subr.mxu0 0.0
    %894 = vmatpush1.msra.mxu0 0.0
    %895 = vmatprep.subr.mxu0 0.0
    %896 = vmatpush1.msra.mxu0 %v55
    %897 = vmatprep.subr.mxu0 0.0
    %898 = vmatpush1.msra.mxu0 %v54
    %899 = vmatprep.subr.mxu0 0.0
    %900 = vmatpush1.msra.mxu0 %v53
    %901 = vmatprep.subr.mxu0 0.0
    %902 = vmatpush1.msra.mxu0 %v52
    %903 = vmatprep.subr.mxu0 0.0
    %904 = vmatpush2.msra.mxu0 0.0
    %905 = vmatprep.subr.mxu0 0.0
    %906 = vmatpush2.msra.mxu0 0.0
    %907 = vmatprep.subr.mxu0 0.0
    %908 = vmatpush2.msra.mxu0 0.0
    %909 = vmatprep.subr.mxu0 0.0
    %910 = vmatpush2.msra.mxu0 0.0
    %911 = vmatprep.subr.mxu0 0.0
    %912 = vmatpush2.msra.mxu0 0.0
    %913 = vmatprep.subr.mxu0 0.0
    %914 = vmatpush2.msra.mxu0 0.0
    %915 = vmatprep.subr.mxu0 0.0
    %916 = vmatpush2.msra.mxu0 0.0
    %917 = vmatprep.subr.mxu0 0.0
    %918 = vmatpush2.msra.mxu0 0.0
    %919 = vmatprep.subr.mxu0 0.0
    %920 = vmatpush2.msra.mxu0 0.0
    %921 = vmatprep.subr.mxu0 0.0
    %922 = vmatpush2.msra.mxu0 0.0
    %923 = vmatprep.subr.mxu0 0.0
    %924 = vmatpush2.msra.mxu0 0.0
    %925 = vmatprep.subr.mxu0 0.0
    %926 = vmatpush2.msra.mxu0 0.0
    %927 = vmatprep.subr.mxu0 0.0
    %928 = vmatpush2.msra.mxu0 0.0
    %929 = vmatprep.subr.mxu0 0.0
    %930 = vmatpush2.msra.mxu0 0.0
    %931 = vmatprep.subr.mxu0 0.0
    %932 = vmatpush2.msra.mxu0 0.0
    %933 = vmatprep.subr.mxu0 0.0
    %934 = vmatpush2.msra.mxu0 0.0
    %935 = vmatprep.mubr.f32.mxu0 0.0
    %936 = vmatmul.mubr.f32.gmra.mxu0 %v869
    %v937 = vpop.f32.mrf.mxu0
    %v938 = vadd.f32 0.0, %v937
    %v939 = vpop.f32.mrf.mxu0
    %940 = vdwg.mxu0
    %v941 = vld [vmem:[#allocation2 + $0x18] sm:$0xff]
    %v942 = vadd.f32 %v941, %v938
    %v943 = vxor.u32 %v942, 2147483648
    %v944 = vmul.f32 %v943, 1.442695
    %v945 = vpow.pop %v944
    %v946 = vadd.f32 %v945, 1.0
    %v947 = vrcp.pop %v946
    %v948 = vmul.f32 1.0, %v947
    %v949 = vmul.f32 %v948, 2.0
    %v950 = vsub.f32 %v949, 1.0
    %v951 = vmul.f32 %v948, %v688
    %953 = vrot.lane.b32.xlu0 %v950, 64
    %v954 = vpop.permute.xlu0 %953
    %v956 = vmul.f32 %v948, %v954
    %958 = vrot.lane.b32.xlu0 %v956, 32
    %v959 = vpop.permute.xlu0 %958
    %v961 = vadd.f32 %v951, %v959
    %v962 = vtanh.pop %v961
    %964 = vrot.lane.b32.xlu0 %v962, 64
    %v965 = vpop.permute.xlu0 %964
    %v967 = vmul.f32 %v948, %v965
    %969 = vrot.lane.b32.xlu0 %v865, 32
    %v970 = vpop.permute.xlu0 %969
    %v971 = vsel %vm218, %v970, 0
    %973 = vmatprep.subr.mxu0 0.0
    %974 = vmatpush1.msra.mxu0 0.0
    %975 = vmatprep.subr.mxu0 0.0
    %976 = vmatpush1.msra.mxu0 0.0
    %977 = vmatprep.subr.mxu0 0.0
    %978 = vmatpush1.msra.mxu0 0.0
    %979 = vmatprep.subr.mxu0 0.0
    %980 = vmatpush1.msra.mxu0 0.0
    %981 = vmatprep.subr.mxu0 0.0
    %982 = vmatpush1.msra.mxu0 0.0
    %983 = vmatprep.subr.mxu0 0.0
    %984 = vmatpush1.msra.mxu0 0.0
    %985 = vmatprep.subr.mxu0 0.0
    %986 = vmatpush1.msra.mxu0 0.0
    %987 = vmatprep.subr.mxu0 0.0
    %988 = vmatpush1.msra.mxu0 0.0
    %989 = vmatprep.subr.mxu0 0.0
    %990 = vmatpush1.msra.mxu0 0.0
    %991 = vmatprep.subr.mxu0 0.0
    %992 = vmatpush1.msra.mxu0 0.0
    %993 = vmatprep.subr.mxu0 0.0
    %994 = vmatpush1.msra.mxu0 0.0
    %995 = vmatprep.subr.mxu0 0.0
    %996 = vmatpush1.msra.mxu0 0.0
    %997 = vmatprep.subr.mxu0 0.0
    %998 = vmatpush1.msra.mxu0 %v59
    %999 = vmatprep.subr.mxu0 0.0
    %1000 = vmatpush1.msra.mxu0 %v58
    %1001 = vmatprep.subr.mxu0 0.0
    %1002 = vmatpush1.msra.mxu0 %v57
    %1003 = vmatprep.subr.mxu0 0.0
    %1004 = vmatpush1.msra.mxu0 %v56
    %1005 = vmatprep.subr.mxu0 0.0
    %1006 = vmatpush2.msra.mxu0 0.0
    %1007 = vmatprep.subr.mxu0 0.0
    %1008 = vmatpush2.msra.mxu0 0.0
    %1009 = vmatprep.subr.mxu0 0.0
    %1010 = vmatpush2.msra.mxu0 0.0
    %1011 = vmatprep.subr.mxu0 0.0
    %1012 = vmatpush2.msra.mxu0 0.0
    %1013 = vmatprep.subr.mxu0 0.0
    %1014 = vmatpush2.msra.mxu0 0.0
    %1015 = vmatprep.subr.mxu0 0.0
    %1016 = vmatpush2.msra.mxu0 0.0
    %1017 = vmatprep.subr.mxu0 0.0
    %1018 = vmatpush2.msra.mxu0 0.0
    %1019 = vmatprep.subr.mxu0 0.0
    %1020 = vmatpush2.msra.mxu0 0.0
    %1021 = vmatprep.subr.mxu0 0.0
    %1022 = vmatpush2.msra.mxu0 0.0
    %1023 = vmatprep.subr.mxu0 0.0
    %1024 = vmatpush2.msra.mxu0 0.0
    %1025 = vmatprep.subr.mxu0 0.0
    %1026 = vmatpush2.msra.mxu0 0.0
    %1027 = vmatprep.subr.mxu0 0.0
    %1028 = vmatpush2.msra.mxu0 0.0
    %1029 = vmatprep.subr.mxu0 0.0
    %1030 = vmatpush2.msra.mxu0 0.0
    %1031 = vmatprep.subr.mxu0 0.0
    %1032 = vmatpush2.msra.mxu0 0.0
    %1033 = vmatprep.subr.mxu0 0.0
    %1034 = vmatpush2.msra.mxu0 0.0
    %1035 = vmatprep.subr.mxu0 0.0
    %1036 = vmatpush2.msra.mxu0 0.0
    %1037 = vmatprep.mubr.f32.mxu0 0.0
    %1038 = vmatmul.mubr.f32.gmra.mxu0 %v971
    %v1039 = vpop.f32.mrf.mxu0
    %v1040 = vadd.f32 0.0, %v1039
    %v1041 = vpop.f32.mrf.mxu0
    %1042 = vdwg.mxu0
    %1043 = vmatprep.subr.mxu0 0.0
    %1044 = vmatpush1.msra.mxu0 0.0
    %1045 = vmatprep.subr.mxu0 0.0
    %1046 = vmatpush1.msra.mxu0 0.0
    %1047 = vmatprep.subr.mxu0 0.0
    %1048 = vmatpush1.msra.mxu0 0.0
    %1049 = vmatprep.subr.mxu0 0.0
    %1050 = vmatpush1.msra.mxu0 0.0
    %1051 = vmatprep.subr.mxu0 0.0
    %1052 = vmatpush1.msra.mxu0 0.0
    %1053 = vmatprep.subr.mxu0 0.0
    %1054 = vmatpush1.msra.mxu0 0.0
    %1055 = vmatprep.subr.mxu0 0.0
    %1056 = vmatpush1.msra.mxu0 0.0
    %1057 = vmatprep.subr.mxu0 0.0
    %1058 = vmatpush1.msra.mxu0 0.0
    %1059 = vmatprep.subr.mxu0 0.0
    %1060 = vmatpush1.msra.mxu0 0.0
    %1061 = vmatprep.subr.mxu0 0.0
    %1062 = vmatpush1.msra.mxu0 0.0
    %1063 = vmatprep.subr.mxu0 0.0
    %1064 = vmatpush1.msra.mxu0 0.0
    %1065 = vmatprep.subr.mxu0 0.0
    %1066 = vmatpush1.msra.mxu0 0.0
    %1067 = vmatprep.subr.mxu0 0.0
    %1068 = vmatpush1.msra.mxu0 %v51
    %1069 = vmatprep.subr.mxu0 0.0
    %1070 = vmatpush1.msra.mxu0 %v50
    %1071 = vmatprep.subr.mxu0 0.0
    %1072 = vmatpush1.msra.mxu0 %v49
    %1073 = vmatprep.subr.mxu0 0.0
    %1074 = vmatpush1.msra.mxu0 %v48
    %1075 = vmatprep.subr.mxu0 0.0
    %1076 = vmatpush2.msra.mxu0 0.0
    %1077 = vmatprep.subr.mxu0 0.0
    %1078 = vmatpush2.msra.mxu0 0.0
    %1079 = vmatprep.subr.mxu0 0.0
    %1080 = vmatpush2.msra.mxu0 0.0
    %1081 = vmatprep.subr.mxu0 0.0
    %1082 = vmatpush2.msra.mxu0 0.0
    %1083 = vmatprep.subr.mxu0 0.0
    %1084 = vmatpush2.msra.mxu0 0.0
    %1085 = vmatprep.subr.mxu0 0.0
    %1086 = vmatpush2.msra.mxu0 0.0
    %1087 = vmatprep.subr.mxu0 0.0
    %1088 = vmatpush2.msra.mxu0 0.0
    %1089 = vmatprep.subr.mxu0 0.0
    %1090 = vmatpush2.msra.mxu0 0.0
    %1091 = vmatprep.subr.mxu0 0.0
    %1092 = vmatpush2.msra.mxu0 0.0
    %1093 = vmatprep.subr.mxu0 0.0
    %1094 = vmatpush2.msra.mxu0 0.0
    %1095 = vmatprep.subr.mxu0 0.0
    %1096 = vmatpush2.msra.mxu0 0.0
    %1097 = vmatprep.subr.mxu0 0.0
    %1098 = vmatpush2.msra.mxu0 0.0
    %1099 = vmatprep.subr.mxu0 0.0
    %1100 = vmatpush2.msra.mxu0 0.0
    %1101 = vmatprep.subr.mxu0 0.0
    %1102 = vmatpush2.msra.mxu0 0.0
    %1103 = vmatprep.subr.mxu0 0.0
    %1104 = vmatpush2.msra.mxu0 0.0
    %1105 = vmatprep.subr.mxu0 0.0
    %1106 = vmatpush2.msra.mxu0 0.0
    %1107 = vmatprep.mubr.f32.mxu0 0.0
    %1108 = vmatmul.mubr.f32.gmra.mxu0 %v869
    %v1109 = vpop.f32.mrf.mxu0
    %v1110 = vadd.f32 %v1040, %v1109
    %v1111 = vpop.f32.mrf.mxu0
    %1112 = vdwg.mxu0
    %v1113 = vadd.f32 %v1110, %v565
    %v1114 = vxor.u32 %v1113, 2147483648
    %v1115 = vmul.f32 %v1114, 1.442695
    %v1116 = vpow.pop %v1115
    %v1117 = vadd.f32 %v1116, 1.0
    %v1118 = vrcp.pop %v1117
    %v1119 = vmul.f32 1.0, %v1118
    %v1120 = vmul.f32 %v1119, 2.0
    %v1121 = vsub.f32 %v1120, 1.0
    %v1122 = vmul.f32 %v1119, %v859
    %1124 = vrot.lane.b32.xlu0 %v1121, 64
    %v1125 = vpop.permute.xlu0 %1124
    %v1127 = vmul.f32 %v1119, %v1125
    %1129 = vrot.lane.b32.xlu0 %v1127, 32
    %v1130 = vpop.permute.xlu0 %1129
    %v1132 = vadd.f32 %v1122, %v1130
    %v1133 = vtanh.pop %v1132
    %1135 = vrot.lane.b32.xlu0 %v1133, 64
    %v1136 = vpop.permute.xlu0 %1135
    %v1138 = vmul.f32 %v1119, %v1136
    %1140 = vrot.lane.b32.xlu0 %v967, 32
    %v1141 = vpop.permute.xlu0 %1140
    %v1142 = vsel %vm218, %v1141, 0
    %1144 = vmatprep.subr.mxu0 0.0
    %1145 = vmatpush1.msra.mxu0 0.0
    %1146 = vmatprep.subr.mxu0 0.0
    %1147 = vmatpush1.msra.mxu0 0.0
    %1148 = vmatprep.subr.mxu0 0.0
    %1149 = vmatpush1.msra.mxu0 0.0
    %1150 = vmatprep.subr.mxu0 0.0
    %1151 = vmatpush1.msra.mxu0 0.0
    %1152 = vmatprep.subr.mxu0 0.0
    %1153 = vmatpush1.msra.mxu0 0.0
    %1154 = vmatprep.subr.mxu0 0.0
    %1155 = vmatpush1.msra.mxu0 0.0
    %1156 = vmatprep.subr.mxu0 0.0
    %1157 = vmatpush1.msra.mxu0 0.0
    %1158 = vmatprep.subr.mxu0 0.0
    %1159 = vmatpush1.msra.mxu0 0.0
    %1160 = vmatprep.subr.mxu0 0.0
    %1161 = vmatpush1.msra.mxu0 0.0
    %1162 = vmatprep.subr.mxu0 0.0
    %1163 = vmatpush1.msra.mxu0 0.0
    %1164 = vmatprep.subr.mxu0 0.0
    %1165 = vmatpush1.msra.mxu0 0.0
    %1166 = vmatprep.subr.mxu0 0.0
    %1167 = vmatpush1.msra.mxu0 0.0
    %1168 = vmatprep.subr.mxu0 0.0
    %1169 = vmatpush1.msra.mxu0 %v55
    %1170 = vmatprep.subr.mxu0 0.0
    %1171 = vmatpush1.msra.mxu0 %v54
    %1172 = vmatprep.subr.mxu0 0.0
    %1173 = vmatpush1.msra.mxu0 %v53
    %1174 = vmatprep.subr.mxu0 0.0
    %1175 = vmatpush1.msra.mxu0 %v52
    %1176 = vmatprep.subr.mxu0 0.0
    %1177 = vmatpush2.msra.mxu0 0.0
    %1178 = vmatprep.subr.mxu0 0.0
    %1179 = vmatpush2.msra.mxu0 0.0
    %1180 = vmatprep.subr.mxu0 0.0
    %1181 = vmatpush2.msra.mxu0 0.0
    %1182 = vmatprep.subr.mxu0 0.0
    %1183 = vmatpush2.msra.mxu0 0.0
    %1184 = vmatprep.subr.mxu0 0.0
    %1185 = vmatpush2.msra.mxu0 0.0
    %1186 = vmatprep.subr.mxu0 0.0
    %1187 = vmatpush2.msra.mxu0 0.0
    %1188 = vmatprep.subr.mxu0 0.0
    %1189 = vmatpush2.msra.mxu0 0.0
    %1190 = vmatprep.subr.mxu0 0.0
    %1191 = vmatpush2.msra.mxu0 0.0
    %1192 = vmatprep.subr.mxu0 0.0
    %1193 = vmatpush2.msra.mxu0 0.0
    %1194 = vmatprep.subr.mxu0 0.0
    %1195 = vmatpush2.msra.mxu0 0.0
    %1196 = vmatprep.subr.mxu0 0.0
    %1197 = vmatpush2.msra.mxu0 0.0
    %1198 = vmatprep.subr.mxu0 0.0
    %1199 = vmatpush2.msra.mxu0 0.0
    %1200 = vmatprep.subr.mxu0 0.0
    %1201 = vmatpush2.msra.mxu0 0.0
    %1202 = vmatprep.subr.mxu0 0.0
    %1203 = vmatpush2.msra.mxu0 0.0
    %1204 = vmatprep.subr.mxu0 0.0
    %1205 = vmatpush2.msra.mxu0 0.0
    %1206 = vmatprep.subr.mxu0 0.0
    %1207 = vmatpush2.msra.mxu0 0.0
    %1208 = vmatprep.mubr.f32.mxu0 0.0
    %1209 = vmatmul.mubr.f32.gmra.mxu0 %v1142
    %v1210 = vpop.f32.mrf.mxu0
    %v1211 = vadd.f32 0.0, %v1210
    %v1212 = vpop.f32.mrf.mxu0
    %1213 = vdwg.mxu0
    %v1214 = vld [vmem:[#allocation2 + $0x20] sm:$0xff]
    %v1215 = vadd.f32 %v1214, %v1211
    %v1216 = vxor.u32 %v1215, 2147483648
    %v1217 = vmul.f32 %v1216, 1.442695
    %v1218 = vpow.pop %v1217
    %v1219 = vadd.f32 %v1218, 1.0
    %v1220 = vrcp.pop %v1219
    %v1221 = vmul.f32 1.0, %v1220
    %v1222 = vmul.f32 %v1221, 2.0
    %v1223 = vsub.f32 %v1222, 1.0
    %v1224 = vmul.f32 %v1221, %v961
    %1226 = vrot.lane.b32.xlu0 %v1223, 64
    %v1227 = vpop.permute.xlu0 %1226
    %v1229 = vmul.f32 %v1221, %v1227
    %1231 = vrot.lane.b32.xlu0 %v1229, 32
    %v1232 = vpop.permute.xlu0 %1231
    %v1234 = vadd.f32 %v1224, %v1232
    %v1235 = vtanh.pop %v1234
    %1237 = vrot.lane.b32.xlu0 %v1235, 64
    %v1238 = vpop.permute.xlu0 %1237
    %v1240 = vmul.f32 %v1221, %v1238
    %1242 = vrot.lane.b32.xlu0 %v1138, 32
    %v1243 = vpop.permute.xlu0 %1242
    %v1244 = vsel %vm218, %v1243, 0
    %1246 = vmatprep.subr.mxu0 0.0
    %1247 = vmatpush1.msra.mxu0 0.0
    %1248 = vmatprep.subr.mxu0 0.0
    %1249 = vmatpush1.msra.mxu0 0.0
    %1250 = vmatprep.subr.mxu0 0.0
    %1251 = vmatpush1.msra.mxu0 0.0
    %1252 = vmatprep.subr.mxu0 0.0
    %1253 = vmatpush1.msra.mxu0 0.0
    %1254 = vmatprep.subr.mxu0 0.0
    %1255 = vmatpush1.msra.mxu0 0.0
    %1256 = vmatprep.subr.mxu0 0.0
    %1257 = vmatpush1.msra.mxu0 0.0
    %1258 = vmatprep.subr.mxu0 0.0
    %1259 = vmatpush1.msra.mxu0 0.0
    %1260 = vmatprep.subr.mxu0 0.0
    %1261 = vmatpush1.msra.mxu0 0.0
    %1262 = vmatprep.subr.mxu0 0.0
    %1263 = vmatpush1.msra.mxu0 0.0
    %1264 = vmatprep.subr.mxu0 0.0
    %1265 = vmatpush1.msra.mxu0 0.0
    %1266 = vmatprep.subr.mxu0 0.0
    %1267 = vmatpush1.msra.mxu0 0.0
    %1268 = vmatprep.subr.mxu0 0.0
    %1269 = vmatpush1.msra.mxu0 0.0
    %1270 = vmatprep.subr.mxu0 0.0
    %1271 = vmatpush1.msra.mxu0 %v59
    %1272 = vmatprep.subr.mxu0 0.0
    %1273 = vmatpush1.msra.mxu0 %v58
    %1274 = vmatprep.subr.mxu0 0.0
    %1275 = vmatpush1.msra.mxu0 %v57
    %1276 = vmatprep.subr.mxu0 0.0
    %1277 = vmatpush1.msra.mxu0 %v56
    %1278 = vmatprep.subr.mxu0 0.0
    %1279 = vmatpush2.msra.mxu0 0.0
    %1280 = vmatprep.subr.mxu0 0.0
    %1281 = vmatpush2.msra.mxu0 0.0
    %1282 = vmatprep.subr.mxu0 0.0
    %1283 = vmatpush2.msra.mxu0 0.0
    %1284 = vmatprep.subr.mxu0 0.0
    %1285 = vmatpush2.msra.mxu0 0.0
    %1286 = vmatprep.subr.mxu0 0.0
    %1287 = vmatpush2.msra.mxu0 0.0
    %1288 = vmatprep.subr.mxu0 0.0
    %1289 = vmatpush2.msra.mxu0 0.0
    %1290 = vmatprep.subr.mxu0 0.0
    %1291 = vmatpush2.msra.mxu0 0.0
    %1292 = vmatprep.subr.mxu0 0.0
    %1293 = vmatpush2.msra.mxu0 0.0
    %1294 = vmatprep.subr.mxu0 0.0
    %1295 = vmatpush2.msra.mxu0 0.0
    %1296 = vmatprep.subr.mxu0 0.0
    %1297 = vmatpush2.msra.mxu0 0.0
    %1298 = vmatprep.subr.mxu0 0.0
    %1299 = vmatpush2.msra.mxu0 0.0
    %1300 = vmatprep.subr.mxu0 0.0
    %1301 = vmatpush2.msra.mxu0 0.0
    %1302 = vmatprep.subr.mxu0 0.0
    %1303 = vmatpush2.msra.mxu0 0.0
    %1304 = vmatprep.subr.mxu0 0.0
    %1305 = vmatpush2.msra.mxu0 0.0
    %1306 = vmatprep.subr.mxu0 0.0
    %1307 = vmatpush2.msra.mxu0 0.0
    %1308 = vmatprep.subr.mxu0 0.0
    %1309 = vmatpush2.msra.mxu0 0.0
    %1310 = vmatprep.mubr.f32.mxu0 0.0
    %1311 = vmatmul.mubr.f32.gmra.mxu0 %v1244
    %v1312 = vpop.f32.mrf.mxu0
    %v1313 = vadd.f32 0.0, %v1312
    %v1314 = vpop.f32.mrf.mxu0
    %1315 = vdwg.mxu0
    %1316 = vmatprep.subr.mxu0 0.0
    %1317 = vmatpush1.msra.mxu0 0.0
    %1318 = vmatprep.subr.mxu0 0.0
    %1319 = vmatpush1.msra.mxu0 0.0
    %1320 = vmatprep.subr.mxu0 0.0
    %1321 = vmatpush1.msra.mxu0 0.0
    %1322 = vmatprep.subr.mxu0 0.0
    %1323 = vmatpush1.msra.mxu0 0.0
    %1324 = vmatprep.subr.mxu0 0.0
    %1325 = vmatpush1.msra.mxu0 0.0
    %1326 = vmatprep.subr.mxu0 0.0
    %1327 = vmatpush1.msra.mxu0 0.0
    %1328 = vmatprep.subr.mxu0 0.0
    %1329 = vmatpush1.msra.mxu0 0.0
    %1330 = vmatprep.subr.mxu0 0.0
    %1331 = vmatpush1.msra.mxu0 0.0
    %1332 = vmatprep.subr.mxu0 0.0
    %1333 = vmatpush1.msra.mxu0 0.0
    %1334 = vmatprep.subr.mxu0 0.0
    %1335 = vmatpush1.msra.mxu0 0.0
    %1336 = vmatprep.subr.mxu0 0.0
    %1337 = vmatpush1.msra.mxu0 0.0
    %1338 = vmatprep.subr.mxu0 0.0
    %1339 = vmatpush1.msra.mxu0 0.0
    %1340 = vmatprep.subr.mxu0 0.0
    %1341 = vmatpush1.msra.mxu0 %v51
    %1342 = vmatprep.subr.mxu0 0.0
    %1343 = vmatpush1.msra.mxu0 %v50
    %1344 = vmatprep.subr.mxu0 0.0
    %1345 = vmatpush1.msra.mxu0 %v49
    %1346 = vmatprep.subr.mxu0 0.0
    %1347 = vmatpush1.msra.mxu0 %v48
    %1348 = vmatprep.subr.mxu0 0.0
    %1349 = vmatpush2.msra.mxu0 0.0
    %1350 = vmatprep.subr.mxu0 0.0
    %1351 = vmatpush2.msra.mxu0 0.0
    %1352 = vmatprep.subr.mxu0 0.0
    %1353 = vmatpush2.msra.mxu0 0.0
    %1354 = vmatprep.subr.mxu0 0.0
    %1355 = vmatpush2.msra.mxu0 0.0
    %1356 = vmatprep.subr.mxu0 0.0
    %1357 = vmatpush2.msra.mxu0 0.0
    %1358 = vmatprep.subr.mxu0 0.0
    %1359 = vmatpush2.msra.mxu0 0.0
    %1360 = vmatprep.subr.mxu0 0.0
    %1361 = vmatpush2.msra.mxu0 0.0
    %1362 = vmatprep.subr.mxu0 0.0
    %1363 = vmatpush2.msra.mxu0 0.0
    %1364 = vmatprep.subr.mxu0 0.0
    %1365 = vmatpush2.msra.mxu0 0.0
    %1366 = vmatprep.subr.mxu0 0.0
    %1367 = vmatpush2.msra.mxu0 0.0
    %1368 = vmatprep.subr.mxu0 0.0
    %1369 = vmatpush2.msra.mxu0 0.0
    %1370 = vmatprep.subr.mxu0 0.0
    %1371 = vmatpush2.msra.mxu0 0.0
    %1372 = vmatprep.subr.mxu0 0.0
    %1373 = vmatpush2.msra.mxu0 0.0
    %1374 = vmatprep.subr.mxu0 0.0
    %1375 = vmatpush2.msra.mxu0 0.0
    %1376 = vmatprep.subr.mxu0 0.0
    %1377 = vmatpush2.msra.mxu0 0.0
    %1378 = vmatprep.subr.mxu0 0.0
    %1379 = vmatpush2.msra.mxu0 0.0
    %1380 = vmatprep.mubr.f32.mxu0 0.0
    %1381 = vmatmul.mubr.f32.gmra.mxu0 %v1142
    %v1382 = vpop.f32.mrf.mxu0
    %v1383 = vadd.f32 %v1313, %v1382
    %v1384 = vpop.f32.mrf.mxu0
    %1385 = vdwg.mxu0
    %v1386 = vadd.f32 %v1383, %v565
    %v1387 = vxor.u32 %v1386, 2147483648
    %v1388 = vmul.f32 %v1387, 1.442695
    %v1389 = vpow.pop %v1388
    %v1390 = vadd.f32 %v1389, 1.0
    %v1391 = vrcp.pop %v1390
    %v1392 = vmul.f32 1.0, %v1391
    %v1393 = vmul.f32 %v1392, 2.0
    %v1394 = vsub.f32 %v1393, 1.0
    %v1395 = vmul.f32 %v1392, %v1132
    %1397 = vrot.lane.b32.xlu0 %v1394, 64
    %v1398 = vpop.permute.xlu0 %1397
    %v1400 = vmul.f32 %v1392, %v1398
    %1402 = vrot.lane.b32.xlu0 %v1400, 32
    %v1403 = vpop.permute.xlu0 %1402
    %v1405 = vadd.f32 %v1395, %v1403
    %v1406 = vtanh.pop %v1405
    %1408 = vrot.lane.b32.xlu0 %v1406, 64
    %v1409 = vpop.permute.xlu0 %1408
    %v1411 = vmul.f32 %v1392, %v1409
    %1413 = vrot.lane.b32.xlu0 %v1240, 32
    %v1414 = vpop.permute.xlu0 %1413
    %v1415 = vsel %vm218, %v1414, 0
    %1417 = vmatprep.subr.mxu0 0.0
    %1418 = vmatpush1.msra.mxu0 0.0
    %1419 = vmatprep.subr.mxu0 0.0
    %1420 = vmatpush1.msra.mxu0 0.0
    %1421 = vmatprep.subr.mxu0 0.0
    %1422 = vmatpush1.msra.mxu0 0.0
    %1423 = vmatprep.subr.mxu0 0.0
    %1424 = vmatpush1.msra.mxu0 0.0
    %1425 = vmatprep.subr.mxu0 0.0
    %1426 = vmatpush1.msra.mxu0 0.0
    %1427 = vmatprep.subr.mxu0 0.0
    %1428 = vmatpush1.msra.mxu0 0.0
    %1429 = vmatprep.subr.mxu0 0.0
    %1430 = vmatpush1.msra.mxu0 0.0
    %1431 = vmatprep.subr.mxu0 0.0
    %1432 = vmatpush1.msra.mxu0 0.0
    %1433 = vmatprep.subr.mxu0 0.0
    %1434 = vmatpush1.msra.mxu0 0.0
    %1435 = vmatprep.subr.mxu0 0.0
    %1436 = vmatpush1.msra.mxu0 0.0
    %1437 = vmatprep.subr.mxu0 0.0
    %1438 = vmatpush1.msra.mxu0 0.0
    %1439 = vmatprep.subr.mxu0 0.0
    %1440 = vmatpush1.msra.mxu0 0.0
    %1441 = vmatprep.subr.mxu0 0.0
    %1442 = vmatpush1.msra.mxu0 %v55
    %1443 = vmatprep.subr.mxu0 0.0
    %1444 = vmatpush1.msra.mxu0 %v54
    %1445 = vmatprep.subr.mxu0 0.0
    %1446 = vmatpush1.msra.mxu0 %v53
    %1447 = vmatprep.subr.mxu0 0.0
    %1448 = vmatpush1.msra.mxu0 %v52
    %1449 = vmatprep.subr.mxu0 0.0
    %1450 = vmatpush2.msra.mxu0 0.0
    %1451 = vmatprep.subr.mxu0 0.0
    %1452 = vmatpush2.msra.mxu0 0.0
    %1453 = vmatprep.subr.mxu0 0.0
    %1454 = vmatpush2.msra.mxu0 0.0
    %1455 = vmatprep.subr.mxu0 0.0
    %1456 = vmatpush2.msra.mxu0 0.0
    %1457 = vmatprep.subr.mxu0 0.0
    %1458 = vmatpush2.msra.mxu0 0.0
    %1459 = vmatprep.subr.mxu0 0.0
    %1460 = vmatpush2.msra.mxu0 0.0
    %1461 = vmatprep.subr.mxu0 0.0
    %1462 = vmatpush2.msra.mxu0 0.0
    %1463 = vmatprep.subr.mxu0 0.0
    %1464 = vmatpush2.msra.mxu0 0.0
    %1465 = vmatprep.subr.mxu0 0.0
    %1466 = vmatpush2.msra.mxu0 0.0
    %1467 = vmatprep.subr.mxu0 0.0
    %1468 = vmatpush2.msra.mxu0 0.0
    %1469 = vmatprep.subr.mxu0 0.0
    %1470 = vmatpush2.msra.mxu0 0.0
    %1471 = vmatprep.subr.mxu0 0.0
    %1472 = vmatpush2.msra.mxu0 0.0
    %1473 = vmatprep.subr.mxu0 0.0
    %1474 = vmatpush2.msra.mxu0 0.0
    %1475 = vmatprep.subr.mxu0 0.0
    %1476 = vmatpush2.msra.mxu0 0.0
    %1477 = vmatprep.subr.mxu0 0.0
    %1478 = vmatpush2.msra.mxu0 0.0
    %1479 = vmatprep.subr.mxu0 0.0
    %1480 = vmatpush2.msra.mxu0 0.0
    %1481 = vmatprep.mubr.f32.mxu0 0.0
    %1482 = vmatmul.mubr.f32.gmra.mxu0 %v1415
    %v1483 = vpop.f32.mrf.mxu0
    %v1484 = vadd.f32 0.0, %v1483
    %v1485 = vpop.f32.mrf.mxu0
    %1486 = vdwg.mxu0
    %v1487 = vld [vmem:[#allocation2 + $0x28] sm:$0xff]
    %v1488 = vadd.f32 %v1487, %v1484
    %v1489 = vxor.u32 %v1488, 2147483648
    %v1490 = vmul.f32 %v1489, 1.442695
    %v1491 = vpow.pop %v1490
    %v1492 = vadd.f32 %v1491, 1.0
    %v1493 = vrcp.pop %v1492
    %v1494 = vmul.f32 1.0, %v1493
    %v1495 = vmul.f32 %v1494, 2.0
    %v1496 = vsub.f32 %v1495, 1.0
    %v1497 = vmul.f32 %v1494, %v1234
    %1499 = vrot.lane.b32.xlu0 %v1496, 64
    %v1500 = vpop.permute.xlu0 %1499
    %v1502 = vmul.f32 %v1494, %v1500
    %1504 = vrot.lane.b32.xlu0 %v1502, 32
    %v1505 = vpop.permute.xlu0 %1504
    %v1507 = vadd.f32 %v1497, %v1505
    %v1508 = vtanh.pop %v1507
    %1510 = vrot.lane.b32.xlu0 %v1508, 64
    %v1511 = vpop.permute.xlu0 %1510
    %v1513 = vmul.f32 %v1494, %v1511
    %1515 = vrot.lane.b32.xlu0 %v1411, 32
    %v1516 = vpop.permute.xlu0 %1515
    %v1517 = vsel %vm218, %v1516, 0
    %1519 = vmatprep.subr.mxu0 0.0
    %1520 = vmatpush1.msra.mxu0 0.0
    %1521 = vmatprep.subr.mxu0 0.0
    %1522 = vmatpush1.msra.mxu0 0.0
    %1523 = vmatprep.subr.mxu0 0.0
    %1524 = vmatpush1.msra.mxu0 0.0
    %1525 = vmatprep.subr.mxu0 0.0
    %1526 = vmatpush1.msra.mxu0 0.0
    %1527 = vmatprep.subr.mxu0 0.0
    %1528 = vmatpush1.msra.mxu0 0.0
    %1529 = vmatprep.subr.mxu0 0.0
    %1530 = vmatpush1.msra.mxu0 0.0
    %1531 = vmatprep.subr.mxu0 0.0
    %1532 = vmatpush1.msra.mxu0 0.0
    %1533 = vmatprep.subr.mxu0 0.0
    %1534 = vmatpush1.msra.mxu0 0.0
    %1535 = vmatprep.subr.mxu0 0.0
    %1536 = vmatpush1.msra.mxu0 0.0
    %1537 = vmatprep.subr.mxu0 0.0
    %1538 = vmatpush1.msra.mxu0 0.0
    %1539 = vmatprep.subr.mxu0 0.0
    %1540 = vmatpush1.msra.mxu0 0.0
    %1541 = vmatprep.subr.mxu0 0.0
    %1542 = vmatpush1.msra.mxu0 0.0
    %1543 = vmatprep.subr.mxu0 0.0
    %1544 = vmatpush1.msra.mxu0 %v59
    %1545 = vmatprep.subr.mxu0 0.0
    %1546 = vmatpush1.msra.mxu0 %v58
    %1547 = vmatprep.subr.mxu0 0.0
    %1548 = vmatpush1.msra.mxu0 %v57
    %1549 = vmatprep.subr.mxu0 0.0
    %1550 = vmatpush1.msra.mxu0 %v56
    %1551 = vmatprep.subr.mxu0 0.0
    %1552 = vmatpush2.msra.mxu0 0.0
    %1553 = vmatprep.subr.mxu0 0.0
    %1554 = vmatpush2.msra.mxu0 0.0
    %1555 = vmatprep.subr.mxu0 0.0
    %1556 = vmatpush2.msra.mxu0 0.0
    %1557 = vmatprep.subr.mxu0 0.0
    %1558 = vmatpush2.msra.mxu0 0.0
    %1559 = vmatprep.subr.mxu0 0.0
    %1560 = vmatpush2.msra.mxu0 0.0
    %1561 = vmatprep.subr.mxu0 0.0
    %1562 = vmatpush2.msra.mxu0 0.0
    %1563 = vmatprep.subr.mxu0 0.0
    %1564 = vmatpush2.msra.mxu0 0.0
    %1565 = vmatprep.subr.mxu0 0.0
    %1566 = vmatpush2.msra.mxu0 0.0
    %1567 = vmatprep.subr.mxu0 0.0
    %1568 = vmatpush2.msra.mxu0 0.0
    %1569 = vmatprep.subr.mxu0 0.0
    %1570 = vmatpush2.msra.mxu0 0.0
    %1571 = vmatprep.subr.mxu0 0.0
    %1572 = vmatpush2.msra.mxu0 0.0
    %1573 = vmatprep.subr.mxu0 0.0
    %1574 = vmatpush2.msra.mxu0 0.0
    %1575 = vmatprep.subr.mxu0 0.0
    %1576 = vmatpush2.msra.mxu0 0.0
    %1577 = vmatprep.subr.mxu0 0.0
    %1578 = vmatpush2.msra.mxu0 0.0
    %1579 = vmatprep.subr.mxu0 0.0
    %1580 = vmatpush2.msra.mxu0 0.0
    %1581 = vmatprep.subr.mxu0 0.0
    %1582 = vmatpush2.msra.mxu0 0.0
    %1583 = vmatprep.mubr.f32.mxu0 0.0
    %1584 = vmatmul.mubr.f32.gmra.mxu0 %v1517
    %v1585 = vpop.f32.mrf.mxu0
    %v1586 = vadd.f32 0.0, %v1585
    %v1587 = vpop.f32.mrf.mxu0
    %1588 = vdwg.mxu0
    %1589 = vmatprep.subr.mxu0 0.0
    %1590 = vmatpush1.msra.mxu0 0.0
    %1591 = vmatprep.subr.mxu0 0.0
    %1592 = vmatpush1.msra.mxu0 0.0
    %1593 = vmatprep.subr.mxu0 0.0
    %1594 = vmatpush1.msra.mxu0 0.0
    %1595 = vmatprep.subr.mxu0 0.0
    %1596 = vmatpush1.msra.mxu0 0.0
    %1597 = vmatprep.subr.mxu0 0.0
    %1598 = vmatpush1.msra.mxu0 0.0
    %1599 = vmatprep.subr.mxu0 0.0
    %1600 = vmatpush1.msra.mxu0 0.0
    %1601 = vmatprep.subr.mxu0 0.0
    %1602 = vmatpush1.msra.mxu0 0.0
    %1603 = vmatprep.subr.mxu0 0.0
    %1604 = vmatpush1.msra.mxu0 0.0
    %1605 = vmatprep.subr.mxu0 0.0
    %1606 = vmatpush1.msra.mxu0 0.0
    %1607 = vmatprep.subr.mxu0 0.0
    %1608 = vmatpush1.msra.mxu0 0.0
    %1609 = vmatprep.subr.mxu0 0.0
    %1610 = vmatpush1.msra.mxu0 0.0
    %1611 = vmatprep.subr.mxu0 0.0
    %1612 = vmatpush1.msra.mxu0 0.0
    %1613 = vmatprep.subr.mxu0 0.0
    %1614 = vmatpush1.msra.mxu0 %v51
    %1615 = vmatprep.subr.mxu0 0.0
    %1616 = vmatpush1.msra.mxu0 %v50
    %1617 = vmatprep.subr.mxu0 0.0
    %1618 = vmatpush1.msra.mxu0 %v49
    %1619 = vmatprep.subr.mxu0 0.0
    %1620 = vmatpush1.msra.mxu0 %v48
    %1621 = vmatprep.subr.mxu0 0.0
    %1622 = vmatpush2.msra.mxu0 0.0
    %1623 = vmatprep.subr.mxu0 0.0
    %1624 = vmatpush2.msra.mxu0 0.0
    %1625 = vmatprep.subr.mxu0 0.0
    %1626 = vmatpush2.msra.mxu0 0.0
    %1627 = vmatprep.subr.mxu0 0.0
    %1628 = vmatpush2.msra.mxu0 0.0
    %1629 = vmatprep.subr.mxu0 0.0
    %1630 = vmatpush2.msra.mxu0 0.0
    %1631 = vmatprep.subr.mxu0 0.0
    %1632 = vmatpush2.msra.mxu0 0.0
    %1633 = vmatprep.subr.mxu0 0.0
    %1634 = vmatpush2.msra.mxu0 0.0
    %1635 = vmatprep.subr.mxu0 0.0
    %1636 = vmatpush2.msra.mxu0 0.0
    %1637 = vmatprep.subr.mxu0 0.0
    %1638 = vmatpush2.msra.mxu0 0.0
    %1639 = vmatprep.subr.mxu0 0.0
    %1640 = vmatpush2.msra.mxu0 0.0
    %1641 = vmatprep.subr.mxu0 0.0
    %1642 = vmatpush2.msra.mxu0 0.0
    %1643 = vmatprep.subr.mxu0 0.0
    %1644 = vmatpush2.msra.mxu0 0.0
    %1645 = vmatprep.subr.mxu0 0.0
    %1646 = vmatpush2.msra.mxu0 0.0
    %1647 = vmatprep.subr.mxu0 0.0
    %1648 = vmatpush2.msra.mxu0 0.0
    %1649 = vmatprep.subr.mxu0 0.0
    %1650 = vmatpush2.msra.mxu0 0.0
    %1651 = vmatprep.subr.mxu0 0.0
    %1652 = vmatpush2.msra.mxu0 0.0
    %1653 = vmatprep.mubr.f32.mxu0 0.0
    %1654 = vmatmul.mubr.f32.gmra.mxu0 %v1415
    %v1655 = vpop.f32.mrf.mxu0
    %v1656 = vadd.f32 %v1586, %v1655
    %v1657 = vpop.f32.mrf.mxu0
    %1658 = vdwg.mxu0
    %v1659 = vadd.f32 %v1656, %v565
    %v1660 = vxor.u32 %v1659, 2147483648
    %v1661 = vmul.f32 %v1660, 1.442695
    %v1662 = vpow.pop %v1661
    %v1663 = vadd.f32 %v1662, 1.0
    %v1664 = vrcp.pop %v1663
    %v1665 = vmul.f32 1.0, %v1664
    %v1666 = vmul.f32 %v1665, 2.0
    %v1667 = vsub.f32 %v1666, 1.0
    %v1668 = vmul.f32 %v1665, %v1405
    %1670 = vrot.lane.b32.xlu0 %v1667, 64
    %v1671 = vpop.permute.xlu0 %1670
    %v1673 = vmul.f32 %v1665, %v1671
    %1675 = vrot.lane.b32.xlu0 %v1673, 32
    %v1676 = vpop.permute.xlu0 %1675
    %v1678 = vadd.f32 %v1668, %v1676
    %v1679 = vtanh.pop %v1678
    %1681 = vrot.lane.b32.xlu0 %v1679, 64
    %v1682 = vpop.permute.xlu0 %1681
    %v1684 = vmul.f32 %v1665, %v1682
    %1686 = vrot.lane.b32.xlu0 %v1513, 32
    %v1687 = vpop.permute.xlu0 %1686
    %v1688 = vsel %vm218, %v1687, 0
    %1690 = vmatprep.subr.mxu0 0.0
    %1691 = vmatpush1.msra.mxu0 0.0
    %1692 = vmatprep.subr.mxu0 0.0
    %1693 = vmatpush1.msra.mxu0 0.0
    %1694 = vmatprep.subr.mxu0 0.0
    %1695 = vmatpush1.msra.mxu0 0.0
    %1696 = vmatprep.subr.mxu0 0.0
    %1697 = vmatpush1.msra.mxu0 0.0
    %1698 = vmatprep.subr.mxu0 0.0
    %1699 = vmatpush1.msra.mxu0 0.0
    %1700 = vmatprep.subr.mxu0 0.0
    %1701 = vmatpush1.msra.mxu0 0.0
    %1702 = vmatprep.subr.mxu0 0.0
    %1703 = vmatpush1.msra.mxu0 0.0
    %1704 = vmatprep.subr.mxu0 0.0
    %1705 = vmatpush1.msra.mxu0 0.0
    %1706 = vmatprep.subr.mxu0 0.0
    %1707 = vmatpush1.msra.mxu0 0.0
    %1708 = vmatprep.subr.mxu0 0.0
    %1709 = vmatpush1.msra.mxu0 0.0
    %1710 = vmatprep.subr.mxu0 0.0
    %1711 = vmatpush1.msra.mxu0 0.0
    %1712 = vmatprep.subr.mxu0 0.0
    %1713 = vmatpush1.msra.mxu0 0.0
    %1714 = vmatprep.subr.mxu0 0.0
    %1715 = vmatpush1.msra.mxu0 %v55
    %1716 = vmatprep.subr.mxu0 0.0
    %1717 = vmatpush1.msra.mxu0 %v54
    %1718 = vmatprep.subr.mxu0 0.0
    %1719 = vmatpush1.msra.mxu0 %v53
    %1720 = vmatprep.subr.mxu0 0.0
    %1721 = vmatpush1.msra.mxu0 %v52
    %1722 = vmatprep.subr.mxu0 0.0
    %1723 = vmatpush2.msra.mxu0 0.0
    %1724 = vmatprep.subr.mxu0 0.0
    %1725 = vmatpush2.msra.mxu0 0.0
    %1726 = vmatprep.subr.mxu0 0.0
    %1727 = vmatpush2.msra.mxu0 0.0
    %1728 = vmatprep.subr.mxu0 0.0
    %1729 = vmatpush2.msra.mxu0 0.0
    %1730 = vmatprep.subr.mxu0 0.0
    %1731 = vmatpush2.msra.mxu0 0.0
    %1732 = vmatprep.subr.mxu0 0.0
    %1733 = vmatpush2.msra.mxu0 0.0
    %1734 = vmatprep.subr.mxu0 0.0
    %1735 = vmatpush2.msra.mxu0 0.0
    %1736 = vmatprep.subr.mxu0 0.0
    %1737 = vmatpush2.msra.mxu0 0.0
    %1738 = vmatprep.subr.mxu0 0.0
    %1739 = vmatpush2.msra.mxu0 0.0
    %1740 = vmatprep.subr.mxu0 0.0
    %1741 = vmatpush2.msra.mxu0 0.0
    %1742 = vmatprep.subr.mxu0 0.0
    %1743 = vmatpush2.msra.mxu0 0.0
    %1744 = vmatprep.subr.mxu0 0.0
    %1745 = vmatpush2.msra.mxu0 0.0
    %1746 = vmatprep.subr.mxu0 0.0
    %1747 = vmatpush2.msra.mxu0 0.0
    %1748 = vmatprep.subr.mxu0 0.0
    %1749 = vmatpush2.msra.mxu0 0.0
    %1750 = vmatprep.subr.mxu0 0.0
    %1751 = vmatpush2.msra.mxu0 0.0
    %1752 = vmatprep.subr.mxu0 0.0
    %1753 = vmatpush2.msra.mxu0 0.0
    %1754 = vmatprep.mubr.f32.mxu0 0.0
    %1755 = vmatmul.mubr.f32.gmra.mxu0 %v1688
    %v1756 = vpop.f32.mrf.mxu0
    %v1757 = vadd.f32 0.0, %v1756
    %v1758 = vpop.f32.mrf.mxu0
    %1759 = vdwg.mxu0
    %v1760 = vld [vmem:[#allocation2 + $0x30] sm:$0xff]
    %v1761 = vadd.f32 %v1760, %v1757
    %v1762 = vxor.u32 %v1761, 2147483648
    %v1763 = vmul.f32 %v1762, 1.442695
    %v1764 = vpow.pop %v1763
    %v1765 = vadd.f32 %v1764, 1.0
    %v1766 = vrcp.pop %v1765
    %v1767 = vmul.f32 1.0, %v1766
    %v1768 = vmul.f32 %v1767, 2.0
    %v1769 = vsub.f32 %v1768, 1.0
    %v1770 = vmul.f32 %v1767, %v1507
    %1772 = vrot.lane.b32.xlu0 %v1769, 64
    %v1773 = vpop.permute.xlu0 %1772
    %v1775 = vmul.f32 %v1767, %v1773
    %1777 = vrot.lane.b32.xlu0 %v1775, 32
    %v1778 = vpop.permute.xlu0 %1777
    %v1780 = vadd.f32 %v1770, %v1778
    %v1781 = vtanh.pop %v1780
    %1783 = vrot.lane.b32.xlu0 %v1781, 64
    %v1784 = vpop.permute.xlu0 %1783
    %v1786 = vmul.f32 %v1767, %v1784
    %1788 = vrot.lane.b32.xlu0 %v1684, 32
    %v1789 = vpop.permute.xlu0 %1788
    %v1790 = vsel %vm218, %v1789, 0
    %1792 = vmatprep.subr.mxu0 0.0
    %1793 = vmatpush1.msra.mxu0 0.0
    %1794 = vmatprep.subr.mxu0 0.0
    %1795 = vmatpush1.msra.mxu0 0.0
    %1796 = vmatprep.subr.mxu0 0.0
    %1797 = vmatpush1.msra.mxu0 0.0
    %1798 = vmatprep.subr.mxu0 0.0
    %1799 = vmatpush1.msra.mxu0 0.0
    %1800 = vmatprep.subr.mxu0 0.0
    %1801 = vmatpush1.msra.mxu0 0.0
    %1802 = vmatprep.subr.mxu0 0.0
    %1803 = vmatpush1.msra.mxu0 0.0
    %1804 = vmatprep.subr.mxu0 0.0
    %1805 = vmatpush1.msra.mxu0 0.0
    %1806 = vmatprep.subr.mxu0 0.0
    %1807 = vmatpush1.msra.mxu0 0.0
    %1808 = vmatprep.subr.mxu0 0.0
    %1809 = vmatpush1.msra.mxu0 0.0
    %1810 = vmatprep.subr.mxu0 0.0
    %1811 = vmatpush1.msra.mxu0 0.0
    %1812 = vmatprep.subr.mxu0 0.0
    %1813 = vmatpush1.msra.mxu0 0.0
    %1814 = vmatprep.subr.mxu0 0.0
    %1815 = vmatpush1.msra.mxu0 0.0
    %1816 = vmatprep.subr.mxu0 0.0
    %1817 = vmatpush1.msra.mxu0 %v59
    %1818 = vmatprep.subr.mxu0 0.0
    %1819 = vmatpush1.msra.mxu0 %v58
    %1820 = vmatprep.subr.mxu0 0.0
    %1821 = vmatpush1.msra.mxu0 %v57
    %1822 = vmatprep.subr.mxu0 0.0
    %1823 = vmatpush1.msra.mxu0 %v56
    %1824 = vmatprep.subr.mxu0 0.0
    %1825 = vmatpush2.msra.mxu0 0.0
    %1826 = vmatprep.subr.mxu0 0.0
    %1827 = vmatpush2.msra.mxu0 0.0
    %1828 = vmatprep.subr.mxu0 0.0
    %1829 = vmatpush2.msra.mxu0 0.0
    %1830 = vmatprep.subr.mxu0 0.0
    %1831 = vmatpush2.msra.mxu0 0.0
    %1832 = vmatprep.subr.mxu0 0.0
    %1833 = vmatpush2.msra.mxu0 0.0
    %1834 = vmatprep.subr.mxu0 0.0
    %1835 = vmatpush2.msra.mxu0 0.0
    %1836 = vmatprep.subr.mxu0 0.0
    %1837 = vmatpush2.msra.mxu0 0.0
    %1838 = vmatprep.subr.mxu0 0.0
    %1839 = vmatpush2.msra.mxu0 0.0
    %1840 = vmatprep.subr.mxu0 0.0
    %1841 = vmatpush2.msra.mxu0 0.0
    %1842 = vmatprep.subr.mxu0 0.0
    %1843 = vmatpush2.msra.mxu0 0.0
    %1844 = vmatprep.subr.mxu0 0.0
    %1845 = vmatpush2.msra.mxu0 0.0
    %1846 = vmatprep.subr.mxu0 0.0
    %1847 = vmatpush2.msra.mxu0 0.0
    %1848 = vmatprep.subr.mxu0 0.0
    %1849 = vmatpush2.msra.mxu0 0.0
    %1850 = vmatprep.subr.mxu0 0.0
    %1851 = vmatpush2.msra.mxu0 0.0
    %1852 = vmatprep.subr.mxu0 0.0
    %1853 = vmatpush2.msra.mxu0 0.0
    %1854 = vmatprep.subr.mxu0 0.0
    %1855 = vmatpush2.msra.mxu0 0.0
    %1856 = vmatprep.mubr.f32.mxu0 0.0
    %1857 = vmatmul.mubr.f32.gmra.mxu0 %v1790
    %v1858 = vpop.f32.mrf.mxu0
    %v1859 = vadd.f32 0.0, %v1858
    %v1860 = vpop.f32.mrf.mxu0
    %1861 = vdwg.mxu0
    %1862 = vmatprep.subr.mxu0 0.0
    %1863 = vmatpush1.msra.mxu0 0.0
    %1864 = vmatprep.subr.mxu0 0.0
    %1865 = vmatpush1.msra.mxu0 0.0
    %1866 = vmatprep.subr.mxu0 0.0
    %1867 = vmatpush1.msra.mxu0 0.0
    %1868 = vmatprep.subr.mxu0 0.0
    %1869 = vmatpush1.msra.mxu0 0.0
    %1870 = vmatprep.subr.mxu0 0.0
    %1871 = vmatpush1.msra.mxu0 0.0
    %1872 = vmatprep.subr.mxu0 0.0
    %1873 = vmatpush1.msra.mxu0 0.0
    %1874 = vmatprep.subr.mxu0 0.0
    %1875 = vmatpush1.msra.mxu0 0.0
    %1876 = vmatprep.subr.mxu0 0.0
    %1877 = vmatpush1.msra.mxu0 0.0
    %1878 = vmatprep.subr.mxu0 0.0
    %1879 = vmatpush1.msra.mxu0 0.0
    %1880 = vmatprep.subr.mxu0 0.0
    %1881 = vmatpush1.msra.mxu0 0.0
    %1882 = vmatprep.subr.mxu0 0.0
    %1883 = vmatpush1.msra.mxu0 0.0
    %1884 = vmatprep.subr.mxu0 0.0
    %1885 = vmatpush1.msra.mxu0 0.0
    %1886 = vmatprep.subr.mxu0 0.0
    %1887 = vmatpush1.msra.mxu0 %v51
    %1888 = vmatprep.subr.mxu0 0.0
    %1889 = vmatpush1.msra.mxu0 %v50
    %1890 = vmatprep.subr.mxu0 0.0
    %1891 = vmatpush1.msra.mxu0 %v49
    %1892 = vmatprep.subr.mxu0 0.0
    %1893 = vmatpush1.msra.mxu0 %v48
    %1894 = vmatprep.subr.mxu0 0.0
    %1895 = vmatpush2.msra.mxu0 0.0
    %1896 = vmatprep.subr.mxu0 0.0
    %1897 = vmatpush2.msra.mxu0 0.0
    %1898 = vmatprep.subr.mxu0 0.0
    %1899 = vmatpush2.msra.mxu0 0.0
    %1900 = vmatprep.subr.mxu0 0.0
    %1901 = vmatpush2.msra.mxu0 0.0
    %1902 = vmatprep.subr.mxu0 0.0
    %1903 = vmatpush2.msra.mxu0 0.0
    %1904 = vmatprep.subr.mxu0 0.0
    %1905 = vmatpush2.msra.mxu0 0.0
    %1906 = vmatprep.subr.mxu0 0.0
    %1907 = vmatpush2.msra.mxu0 0.0
    %1908 = vmatprep.subr.mxu0 0.0
    %1909 = vmatpush2.msra.mxu0 0.0
    %1910 = vmatprep.subr.mxu0 0.0
    %1911 = vmatpush2.msra.mxu0 0.0
    %1912 = vmatprep.subr.mxu0 0.0
    %1913 = vmatpush2.msra.mxu0 0.0
    %1914 = vmatprep.subr.mxu0 0.0
    %1915 = vmatpush2.msra.mxu0 0.0
    %1916 = vmatprep.subr.mxu0 0.0
    %1917 = vmatpush2.msra.mxu0 0.0
    %1918 = vmatprep.subr.mxu0 0.0
    %1919 = vmatpush2.msra.mxu0 0.0
    %1920 = vmatprep.subr.mxu0 0.0
    %1921 = vmatpush2.msra.mxu0 0.0
    %1922 = vmatprep.subr.mxu0 0.0
    %1923 = vmatpush2.msra.mxu0 0.0
    %1924 = vmatprep.subr.mxu0 0.0
    %1925 = vmatpush2.msra.mxu0 0.0
    %1926 = vmatprep.mubr.f32.mxu0 0.0
    %1927 = vmatmul.mubr.f32.gmra.mxu0 %v1688
    %v1928 = vpop.f32.mrf.mxu0
    %v1929 = vadd.f32 %v1859, %v1928
    %v1930 = vpop.f32.mrf.mxu0
    %1931 = vdwg.mxu0
    %v1932 = vadd.f32 %v1929, %v565
    %v1933 = vxor.u32 %v1932, 2147483648
    %v1934 = vmul.f32 %v1933, 1.442695
    %v1935 = vpow.pop %v1934
    %v1936 = vadd.f32 %v1935, 1.0
    %v1937 = vrcp.pop %v1936
    %v1938 = vmul.f32 1.0, %v1937
    %v1939 = vmul.f32 %v1938, 2.0
    %v1940 = vsub.f32 %v1939, 1.0
    %v1941 = vmul.f32 %v1938, %v1678
    %1943 = vrot.lane.b32.xlu0 %v1940, 64
    %v1944 = vpop.permute.xlu0 %1943
    %v1946 = vmul.f32 %v1938, %v1944
    %1948 = vrot.lane.b32.xlu0 %v1946, 32
    %v1949 = vpop.permute.xlu0 %1948
    %v1951 = vadd.f32 %v1941, %v1949
    %v1952 = vtanh.pop %v1951
    %1954 = vrot.lane.b32.xlu0 %v1952, 64
    %v1955 = vpop.permute.xlu0 %1954
    %v1957 = vmul.f32 %v1938, %v1955
    %1959 = vrot.lane.b32.xlu0 %v1786, 32
    %v1960 = vpop.permute.xlu0 %1959
    %v1961 = vsel %vm218, %v1960, 0
    %1963 = vmatprep.subr.mxu0 0.0
    %1964 = vmatpush1.msra.mxu0 0.0
    %1965 = vmatprep.subr.mxu0 0.0
    %1966 = vmatpush1.msra.mxu0 0.0
    %1967 = vmatprep.subr.mxu0 0.0
    %1968 = vmatpush1.msra.mxu0 0.0
    %1969 = vmatprep.subr.mxu0 0.0
    %1970 = vmatpush1.msra.mxu0 0.0
    %1971 = vmatprep.subr.mxu0 0.0
    %1972 = vmatpush1.msra.mxu0 0.0
    %1973 = vmatprep.subr.mxu0 0.0
    %1974 = vmatpush1.msra.mxu0 0.0
    %1975 = vmatprep.subr.mxu0 0.0
    %1976 = vmatpush1.msra.mxu0 0.0
    %1977 = vmatprep.subr.mxu0 0.0
    %1978 = vmatpush1.msra.mxu0 0.0
    %1979 = vmatprep.subr.mxu0 0.0
    %1980 = vmatpush1.msra.mxu0 0.0
    %1981 = vmatprep.subr.mxu0 0.0
    %1982 = vmatpush1.msra.mxu0 0.0
    %1983 = vmatprep.subr.mxu0 0.0
    %1984 = vmatpush1.msra.mxu0 0.0
    %1985 = vmatprep.subr.mxu0 0.0
    %1986 = vmatpush1.msra.mxu0 0.0
    %1987 = vmatprep.subr.mxu0 0.0
    %1988 = vmatpush1.msra.mxu0 %v55
    %1989 = vmatprep.subr.mxu0 0.0
    %1990 = vmatpush1.msra.mxu0 %v54
    %1991 = vmatprep.subr.mxu0 0.0
    %1992 = vmatpush1.msra.mxu0 %v53
    %1993 = vmatprep.subr.mxu0 0.0
    %1994 = vmatpush1.msra.mxu0 %v52
    %1995 = vmatprep.subr.mxu0 0.0
    %1996 = vmatpush2.msra.mxu0 0.0
    %1997 = vmatprep.subr.mxu0 0.0
    %1998 = vmatpush2.msra.mxu0 0.0
    %1999 = vmatprep.subr.mxu0 0.0
    %2000 = vmatpush2.msra.mxu0 0.0
    %2001 = vmatprep.subr.mxu0 0.0
    %2002 = vmatpush2.msra.mxu0 0.0
    %2003 = vmatprep.subr.mxu0 0.0
    %2004 = vmatpush2.msra.mxu0 0.0
    %2005 = vmatprep.subr.mxu0 0.0
    %2006 = vmatpush2.msra.mxu0 0.0
    %2007 = vmatprep.subr.mxu0 0.0
    %2008 = vmatpush2.msra.mxu0 0.0
    %2009 = vmatprep.subr.mxu0 0.0
    %2010 = vmatpush2.msra.mxu0 0.0
    %2011 = vmatprep.subr.mxu0 0.0
    %2012 = vmatpush2.msra.mxu0 0.0
    %2013 = vmatprep.subr.mxu0 0.0
    %2014 = vmatpush2.msra.mxu0 0.0
    %2015 = vmatprep.subr.mxu0 0.0
    %2016 = vmatpush2.msra.mxu0 0.0
    %2017 = vmatprep.subr.mxu0 0.0
    %2018 = vmatpush2.msra.mxu0 0.0
    %2019 = vmatprep.subr.mxu0 0.0
    %2020 = vmatpush2.msra.mxu0 0.0
    %2021 = vmatprep.subr.mxu0 0.0
    %2022 = vmatpush2.msra.mxu0 0.0
    %2023 = vmatprep.subr.mxu0 0.0
    %2024 = vmatpush2.msra.mxu0 0.0
    %2025 = vmatprep.subr.mxu0 0.0
    %2026 = vmatpush2.msra.mxu0 0.0
    %2027 = vmatprep.mubr.f32.mxu0 0.0
    %2028 = vmatmul.mubr.f32.gmra.mxu0 %v1961
    %v2029 = vpop.f32.mrf.mxu0
    %v2030 = vadd.f32 0.0, %v2029
    %v2031 = vpop.f32.mrf.mxu0
    %2032 = vdwg.mxu0
    %v2033 = vld [vmem:[#allocation2 + $0x38] sm:$0xff]
    %v2034 = vadd.f32 %v2033, %v2030
    %v2035 = vxor.u32 %v2034, 2147483648
    %v2036 = vmul.f32 %v2035, 1.442695
    %v2037 = vpow.pop %v2036
    %v2038 = vadd.f32 %v2037, 1.0
    %v2039 = vrcp.pop %v2038
    %v2040 = vmul.f32 1.0, %v2039
    %v2041 = vmul.f32 %v2040, 2.0
    %v2042 = vsub.f32 %v2041, 1.0
    %v2043 = vmul.f32 %v2040, %v1780
    %2045 = vrot.lane.b32.xlu0 %v2042, 64
    %v2046 = vpop.permute.xlu0 %2045
    %v2048 = vmul.f32 %v2040, %v2046
    %2050 = vrot.lane.b32.xlu0 %v2048, 32
    %v2051 = vpop.permute.xlu0 %2050
    %v2053 = vadd.f32 %v2043, %v2051
    %v2054 = vtanh.pop %v2053
    %2056 = vrot.lane.b32.xlu0 %v2054, 64
    %v2057 = vpop.permute.xlu0 %2056
    %v2059 = vmul.f32 %v2040, %v2057
    %2061 = vrot.lane.b32.xlu0 %v1957, 32
    %v2062 = vpop.permute.xlu0 %2061
    %v2063 = vsel %vm218, %v2062, 0
    %2065 = vmatprep.subr.mxu0 0.0
    %2066 = vmatpush1.msra.mxu0 0.0
    %2067 = vmatprep.subr.mxu0 0.0
    %2068 = vmatpush1.msra.mxu0 0.0
    %2069 = vmatprep.subr.mxu0 0.0
    %2070 = vmatpush1.msra.mxu0 0.0
    %2071 = vmatprep.subr.mxu0 0.0
    %2072 = vmatpush1.msra.mxu0 0.0
    %2073 = vmatprep.subr.mxu0 0.0
    %2074 = vmatpush1.msra.mxu0 0.0
    %2075 = vmatprep.subr.mxu0 0.0
    %2076 = vmatpush1.msra.mxu0 0.0
    %2077 = vmatprep.subr.mxu0 0.0
    %2078 = vmatpush1.msra.mxu0 0.0
    %2079 = vmatprep.subr.mxu0 0.0
    %2080 = vmatpush1.msra.mxu0 0.0
    %2081 = vmatprep.subr.mxu0 0.0
    %2082 = vmatpush1.msra.mxu0 0.0
    %2083 = vmatprep.subr.mxu0 0.0
    %2084 = vmatpush1.msra.mxu0 0.0
    %2085 = vmatprep.subr.mxu0 0.0
    %2086 = vmatpush1.msra.mxu0 0.0
    %2087 = vmatprep.subr.mxu0 0.0
    %2088 = vmatpush1.msra.mxu0 0.0
    %2089 = vmatprep.subr.mxu0 0.0
    %2090 = vmatpush1.msra.mxu0 %v59
    %2091 = vmatprep.subr.mxu0 0.0
    %2092 = vmatpush1.msra.mxu0 %v58
    %2093 = vmatprep.subr.mxu0 0.0
    %2094 = vmatpush1.msra.mxu0 %v57
    %2095 = vmatprep.subr.mxu0 0.0
    %2096 = vmatpush1.msra.mxu0 %v56
    %2097 = vmatprep.subr.mxu0 0.0
    %2098 = vmatpush2.msra.mxu0 0.0
    %2099 = vmatprep.subr.mxu0 0.0
    %2100 = vmatpush2.msra.mxu0 0.0
    %2101 = vmatprep.subr.mxu0 0.0
    %2102 = vmatpush2.msra.mxu0 0.0
    %2103 = vmatprep.subr.mxu0 0.0
    %2104 = vmatpush2.msra.mxu0 0.0
    %2105 = vmatprep.subr.mxu0 0.0
    %2106 = vmatpush2.msra.mxu0 0.0
    %2107 = vmatprep.subr.mxu0 0.0
    %2108 = vmatpush2.msra.mxu0 0.0
    %2109 = vmatprep.subr.mxu0 0.0
    %2110 = vmatpush2.msra.mxu0 0.0
    %2111 = vmatprep.subr.mxu0 0.0
    %2112 = vmatpush2.msra.mxu0 0.0
    %2113 = vmatprep.subr.mxu0 0.0
    %2114 = vmatpush2.msra.mxu0 0.0
    %2115 = vmatprep.subr.mxu0 0.0
    %2116 = vmatpush2.msra.mxu0 0.0
    %2117 = vmatprep.subr.mxu0 0.0
    %2118 = vmatpush2.msra.mxu0 0.0
    %2119 = vmatprep.subr.mxu0 0.0
    %2120 = vmatpush2.msra.mxu0 0.0
    %2121 = vmatprep.subr.mxu0 0.0
    %2122 = vmatpush2.msra.mxu0 0.0
    %2123 = vmatprep.subr.mxu0 0.0
    %2124 = vmatpush2.msra.mxu0 0.0
    %2125 = vmatprep.subr.mxu0 0.0
    %2126 = vmatpush2.msra.mxu0 0.0
    %2127 = vmatprep.subr.mxu0 0.0
    %2128 = vmatpush2.msra.mxu0 0.0
    %2129 = vmatprep.mubr.f32.mxu0 0.0
    %2130 = vmatmul.mubr.f32.gmra.mxu0 %v2063
    %v2131 = vpop.f32.mrf.mxu0
    %v2132 = vadd.f32 0.0, %v2131
    %v2133 = vpop.f32.mrf.mxu0
    %2134 = vdwg.mxu0
    %2135 = vmatprep.subr.mxu0 0.0
    %2136 = vmatpush1.msra.mxu0 0.0
    %2137 = vmatprep.subr.mxu0 0.0
    %2138 = vmatpush1.msra.mxu0 0.0
    %2139 = vmatprep.subr.mxu0 0.0
    %2140 = vmatpush1.msra.mxu0 0.0
    %2141 = vmatprep.subr.mxu0 0.0
    %2142 = vmatpush1.msra.mxu0 0.0
    %2143 = vmatprep.subr.mxu0 0.0
    %2144 = vmatpush1.msra.mxu0 0.0
    %2145 = vmatprep.subr.mxu0 0.0
    %2146 = vmatpush1.msra.mxu0 0.0
    %2147 = vmatprep.subr.mxu0 0.0
    %2148 = vmatpush1.msra.mxu0 0.0
    %2149 = vmatprep.subr.mxu0 0.0
    %2150 = vmatpush1.msra.mxu0 0.0
    %2151 = vmatprep.subr.mxu0 0.0
    %2152 = vmatpush1.msra.mxu0 0.0
    %2153 = vmatprep.subr.mxu0 0.0
    %2154 = vmatpush1.msra.mxu0 0.0
    %2155 = vmatprep.subr.mxu0 0.0
    %2156 = vmatpush1.msra.mxu0 0.0
    %2157 = vmatprep.subr.mxu0 0.0
    %2158 = vmatpush1.msra.mxu0 0.0
    %2159 = vmatprep.subr.mxu0 0.0
    %2160 = vmatpush1.msra.mxu0 %v51
    %2161 = vmatprep.subr.mxu0 0.0
    %2162 = vmatpush1.msra.mxu0 %v50
    %2163 = vmatprep.subr.mxu0 0.0
    %2164 = vmatpush1.msra.mxu0 %v49
    %2165 = vmatprep.subr.mxu0 0.0
    %2166 = vmatpush1.msra.mxu0 %v48
    %2167 = vmatprep.subr.mxu0 0.0
    %2168 = vmatpush2.msra.mxu0 0.0
    %2169 = vmatprep.subr.mxu0 0.0
    %2170 = vmatpush2.msra.mxu0 0.0
    %2171 = vmatprep.subr.mxu0 0.0
    %2172 = vmatpush2.msra.mxu0 0.0
    %2173 = vmatprep.subr.mxu0 0.0
    %2174 = vmatpush2.msra.mxu0 0.0
    %2175 = vmatprep.subr.mxu0 0.0
    %2176 = vmatpush2.msra.mxu0 0.0
    %2177 = vmatprep.subr.mxu0 0.0
    %2178 = vmatpush2.msra.mxu0 0.0
    %2179 = vmatprep.subr.mxu0 0.0
    %2180 = vmatpush2.msra.mxu0 0.0
    %2181 = vmatprep.subr.mxu0 0.0
    %2182 = vmatpush2.msra.mxu0 0.0
    %2183 = vmatprep.subr.mxu0 0.0
    %2184 = vmatpush2.msra.mxu0 0.0
    %2185 = vmatprep.subr.mxu0 0.0
    %2186 = vmatpush2.msra.mxu0 0.0
    %2187 = vmatprep.subr.mxu0 0.0
    %2188 = vmatpush2.msra.mxu0 0.0
    %2189 = vmatprep.subr.mxu0 0.0
    %2190 = vmatpush2.msra.mxu0 0.0
    %2191 = vmatprep.subr.mxu0 0.0
    %2192 = vmatpush2.msra.mxu0 0.0
    %2193 = vmatprep.subr.mxu0 0.0
    %2194 = vmatpush2.msra.mxu0 0.0
    %2195 = vmatprep.subr.mxu0 0.0
    %2196 = vmatpush2.msra.mxu0 0.0
    %2197 = vmatprep.subr.mxu0 0.0
    %2198 = vmatpush2.msra.mxu0 0.0
    %2199 = vmatprep.mubr.f32.mxu0 0.0
    %2200 = vmatmul.mubr.f32.gmra.mxu0 %v1961
    %v2201 = vpop.f32.mrf.mxu0
    %v2202 = vadd.f32 %v2132, %v2201
    %v2203 = vpop.f32.mrf.mxu0
    %2204 = vdwg.mxu0
    %v2205 = vadd.f32 %v2202, %v565
    %v2206 = vxor.u32 %v2205, 2147483648
    %v2207 = vmul.f32 %v2206, 1.442695
    %v2208 = vpow.pop %v2207
    %v2209 = vadd.f32 %v2208, 1.0
    %v2210 = vrcp.pop %v2209
    %v2211 = vmul.f32 1.0, %v2210
    %v2212 = vmul.f32 %v2211, 2.0
    %v2213 = vsub.f32 %v2212, 1.0
    %v2214 = vmul.f32 %v2211, %v1951
    %2216 = vrot.lane.b32.xlu0 %v2213, 64
    %v2217 = vpop.permute.xlu0 %2216
    %v2219 = vmul.f32 %v2211, %v2217
    %2221 = vrot.lane.b32.xlu0 %v2219, 32
    %v2222 = vpop.permute.xlu0 %2221
    %v2224 = vadd.f32 %v2214, %v2222
    %v2225 = vtanh.pop %v2224
    %2227 = vrot.lane.b32.xlu0 %v2225, 64
    %v2228 = vpop.permute.xlu0 %2227
    %v2230 = vmul.f32 %v2211, %v2228
    %2232 = vrot.lane.b32.xlu0 %v2230, 32
    %v2233 = vpop.permute.xlu0 %2232
    %v2234 = vsel %vm218, %v2233, 0
    %2236 = vmatprep.subr.mxu0 0.0
    %2237 = vmatpush1.msra.mxu0 0.0
    %2238 = vmatprep.subr.mxu0 0.0
    %2239 = vmatpush1.msra.mxu0 0.0
    %2240 = vmatprep.subr.mxu0 0.0
    %2241 = vmatpush1.msra.mxu0 0.0
    %2242 = vmatprep.subr.mxu0 0.0
    %2243 = vmatpush1.msra.mxu0 0.0
    %2244 = vmatprep.subr.mxu0 0.0
    %2245 = vmatpush1.msra.mxu0 0.0
    %2246 = vmatprep.subr.mxu0 0.0
    %2247 = vmatpush1.msra.mxu0 0.0
    %2248 = vmatprep.subr.mxu0 0.0
    %2249 = vmatpush1.msra.mxu0 0.0
    %2250 = vmatprep.subr.mxu0 0.0
    %2251 = vmatpush1.msra.mxu0 0.0
    %2252 = vmatprep.subr.mxu0 0.0
    %2253 = vmatpush1.msra.mxu0 0.0
    %2254 = vmatprep.subr.mxu0 0.0
    %2255 = vmatpush1.msra.mxu0 0.0
    %2256 = vmatprep.subr.mxu0 0.0
    %2257 = vmatpush1.msra.mxu0 0.0
    %2258 = vmatprep.subr.mxu0 0.0
    %2259 = vmatpush1.msra.mxu0 0.0
    %2260 = vmatprep.subr.mxu0 0.0
    %2261 = vmatpush1.msra.mxu0 %v59
    %2262 = vmatprep.subr.mxu0 0.0
    %2263 = vmatpush1.msra.mxu0 %v58
    %2264 = vmatprep.subr.mxu0 0.0
    %2265 = vmatpush1.msra.mxu0 %v57
    %2266 = vmatprep.subr.mxu0 0.0
    %2267 = vmatpush1.msra.mxu0 %v56
    %2268 = vmatprep.subr.mxu0 0.0
    %2269 = vmatpush2.msra.mxu0 0.0
    %2270 = vmatprep.subr.mxu0 0.0
    %2271 = vmatpush2.msra.mxu0 0.0
    %2272 = vmatprep.subr.mxu0 0.0
    %2273 = vmatpush2.msra.mxu0 0.0
    %2274 = vmatprep.subr.mxu0 0.0
    %2275 = vmatpush2.msra.mxu0 0.0
    %2276 = vmatprep.subr.mxu0 0.0
    %2277 = vmatpush2.msra.mxu0 0.0
    %2278 = vmatprep.subr.mxu0 0.0
    %2279 = vmatpush2.msra.mxu0 0.0
    %2280 = vmatprep.subr.mxu0 0.0
    %2281 = vmatpush2.msra.mxu0 0.0
    %2282 = vmatprep.subr.mxu0 0.0
    %2283 = vmatpush2.msra.mxu0 0.0
    %2284 = vmatprep.subr.mxu0 0.0
    %2285 = vmatpush2.msra.mxu0 0.0
    %2286 = vmatprep.subr.mxu0 0.0
    %2287 = vmatpush2.msra.mxu0 0.0
    %2288 = vmatprep.subr.mxu0 0.0
    %2289 = vmatpush2.msra.mxu0 0.0
    %2290 = vmatprep.subr.mxu0 0.0
    %2291 = vmatpush2.msra.mxu0 0.0
    %2292 = vmatprep.subr.mxu0 0.0
    %2293 = vmatpush2.msra.mxu0 0.0
    %2294 = vmatprep.subr.mxu0 0.0
    %2295 = vmatpush2.msra.mxu0 0.0
    %2296 = vmatprep.subr.mxu0 0.0
    %2297 = vmatpush2.msra.mxu0 0.0
    %2298 = vmatprep.subr.mxu0 0.0
    %2299 = vmatpush2.msra.mxu0 0.0
    %2300 = vmatprep.mubr.f32.mxu0 0.0
    %2301 = vmatmul.mubr.f32.gmra.mxu0 %v2234
    %v2302 = vpop.f32.mrf.mxu0
    %v2303 = vadd.f32 0.0, %v2302
    %v2304 = vpop.f32.mrf.mxu0
    %2305 = vdwg.mxu0
    %2307 = vrot.lane.b32.xlu0 %v2059, 32
    %v2308 = vpop.permute.xlu0 %2307
    %v2309 = vsel %vm218, %v2308, 0
    %2311 = vmatprep.subr.mxu0 0.0
    %2312 = vmatpush1.msra.mxu0 0.0
    %2313 = vmatprep.subr.mxu0 0.0
    %2314 = vmatpush1.msra.mxu0 0.0
    %2315 = vmatprep.subr.mxu0 0.0
    %2316 = vmatpush1.msra.mxu0 0.0
    %2317 = vmatprep.subr.mxu0 0.0
    %2318 = vmatpush1.msra.mxu0 0.0
    %2319 = vmatprep.subr.mxu0 0.0
    %2320 = vmatpush1.msra.mxu0 0.0
    %2321 = vmatprep.subr.mxu0 0.0
    %2322 = vmatpush1.msra.mxu0 0.0
    %2323 = vmatprep.subr.mxu0 0.0
    %2324 = vmatpush1.msra.mxu0 0.0
    %2325 = vmatprep.subr.mxu0 0.0
    %2326 = vmatpush1.msra.mxu0 0.0
    %2327 = vmatprep.subr.mxu0 0.0
    %2328 = vmatpush1.msra.mxu0 0.0
    %2329 = vmatprep.subr.mxu0 0.0
    %2330 = vmatpush1.msra.mxu0 0.0
    %2331 = vmatprep.subr.mxu0 0.0
    %2332 = vmatpush1.msra.mxu0 0.0
    %2333 = vmatprep.subr.mxu0 0.0
    %2334 = vmatpush1.msra.mxu0 0.0
    %2335 = vmatprep.subr.mxu0 0.0
    %2336 = vmatpush1.msra.mxu0 %v51
    %2337 = vmatprep.subr.mxu0 0.0
    %2338 = vmatpush1.msra.mxu0 %v50
    %2339 = vmatprep.subr.mxu0 0.0
    %2340 = vmatpush1.msra.mxu0 %v49
    %2341 = vmatprep.subr.mxu0 0.0
    %2342 = vmatpush1.msra.mxu0 %v48
    %2343 = vmatprep.subr.mxu0 0.0
    %2344 = vmatpush2.msra.mxu0 0.0
    %2345 = vmatprep.subr.mxu0 0.0
    %2346 = vmatpush2.msra.mxu0 0.0
    %2347 = vmatprep.subr.mxu0 0.0
    %2348 = vmatpush2.msra.mxu0 0.0
    %2349 = vmatprep.subr.mxu0 0.0
    %2350 = vmatpush2.msra.mxu0 0.0
    %2351 = vmatprep.subr.mxu0 0.0
    %2352 = vmatpush2.msra.mxu0 0.0
    %2353 = vmatprep.subr.mxu0 0.0
    %2354 = vmatpush2.msra.mxu0 0.0
    %2355 = vmatprep.subr.mxu0 0.0
    %2356 = vmatpush2.msra.mxu0 0.0
    %2357 = vmatprep.subr.mxu0 0.0
    %2358 = vmatpush2.msra.mxu0 0.0
    %2359 = vmatprep.subr.mxu0 0.0
    %2360 = vmatpush2.msra.mxu0 0.0
    %2361 = vmatprep.subr.mxu0 0.0
    %2362 = vmatpush2.msra.mxu0 0.0
    %2363 = vmatprep.subr.mxu0 0.0
    %2364 = vmatpush2.msra.mxu0 0.0
    %2365 = vmatprep.subr.mxu0 0.0
    %2366 = vmatpush2.msra.mxu0 0.0
    %2367 = vmatprep.subr.mxu0 0.0
    %2368 = vmatpush2.msra.mxu0 0.0
    %2369 = vmatprep.subr.mxu0 0.0
    %2370 = vmatpush2.msra.mxu0 0.0
    %2371 = vmatprep.subr.mxu0 0.0
    %2372 = vmatpush2.msra.mxu0 0.0
    %2373 = vmatprep.subr.mxu0 0.0
    %2374 = vmatpush2.msra.mxu0 0.0
    %2375 = vmatprep.mubr.f32.mxu0 0.0
    %2376 = vmatmul.mubr.f32.gmra.mxu0 %v2309
    %v2377 = vpop.f32.mrf.mxu0
    %v2378 = vadd.f32 %v2303, %v2377
    %v2379 = vpop.f32.mrf.mxu0
    %2380 = vdwg.mxu0
    %v2381 = vadd.f32 %v2378, %v565
    %v2382 = vxor.u32 %v2381, 2147483648
    %v2383 = vmul.f32 %v2382, 1.442695
    %v2384 = vpow.pop %v2383
    %v2385 = vadd.f32 %v2384, 1.0
    %v2386 = vrcp.pop %v2385
    %v2387 = vmul.f32 1.0, %v2386
    %v2388 = vmul.f32 %v2387, 2.0
    %v2389 = vsub.f32 %v2388, 1.0
    %v2390 = vmul.f32 %v2387, %v2224
    %2392 = vrot.lane.b32.xlu0 %v2389, 64
    %v2393 = vpop.permute.xlu0 %2392
    %v2395 = vmul.f32 %v2387, %v2393
    %2397 = vrot.lane.b32.xlu0 %v2395, 32
    %v2398 = vpop.permute.xlu0 %2397
    %v2400 = vadd.f32 %v2390, %v2398
    %v2401 = vtanh.pop %v2400
    %2403 = vrot.lane.b32.xlu0 %v2401, 64
    %v2404 = vpop.permute.xlu0 %2403
    %v2406 = vmul.f32 %v2387, %v2404
    %v2407 = vld [vmem:[%s7] sm:$0x1]
    %v2409 = vlaneseq
    %v2410 = vshrl.u32 %v2409, 7
    %v2411 = vsub.s32 0, %v2410
    %v2412 = vrot.slane %v2407, %v2411
    %2413 = vrot.lane.b32.xlu0 %v2412, 96
    %v2414 = vpop.permute.xlu0 %2413
    %v2416 = vmul.f32 %v2406, %v2414
    %2418 = vrot.lane.b32.xlu0 %v2416, 32
    %v2419 = vpop.permute.xlu0 %2418
    %v2421 = vsel %vm218, %v2419, 0.0
    %2422 = vadd.xlane.f32.xlu0 %v2421
    %v2423 = vpop.xlane.xlu0 %2422
    %s2424 = sld [smem:[#allocation3]]
    %v2425 = vstv %s2424
    %v2426 = vadd.f32 %v2423, %v2425
    %vm2427 = vcmask 7168
    %2428 = vst.msk [vmem:[%s9] sm:$0xff] %vm2427, %v2426
    // Predicated region
    $region42: #{tpu_custom_call.1} parent=1 // pred_check
      _
    $region43: #{tpu_custom_call.1} parent=1 // pred_check_branch
      %2430 = sbr.rel (0) target = $region45
    $region44: #{tpu_custom_call.1} parent=1 // pred_region
      _
    $region45: #{tpu_custom_call.1} parent=1 // pred_fallthru
      _
    // Predicated region
    $region46: #{tpu_custom_call.1} parent=1 // pred_check
      _
    $region47: #{tpu_custom_call.1} parent=1 // pred_check_branch
      %2432 = sbr.rel (0) target = $region49
    $region48: #{tpu_custom_call.1} parent=1 // pred_region
      _
    $region49: #{tpu_custom_call.1} parent=1 // pred_fallthru
      _
    %2433 = vsyncpa [#allocation5], 1

</llo_original>
